<compile_context>
chip_gen: v6e
topology: v6e:2x2x1
jax: 0.10.0
libtpu: 0.0.40
codegen_flags: <defaults>
</compile_context>

<pallas_src>
import functools

import jax
import jax.numpy as jnp
from jax import lax
from jax.experimental import pallas as pl
from jax.experimental.pallas import tpu as pltpu


# ----------------------------------------------------------------------------
# helpers
# ----------------------------------------------------------------------------
def _round_up(n, m):
    return ((n + m - 1) // m) * m


def _pick_row_block(n, preferred=512):
    """Row-tile size: multiple of 8 (f32 sublanes), capped at `preferred`."""
    return min(preferred, _round_up(n, 8))


# ----------------------------------------------------------------------------
# Kernel 1: hoisted input projection for both LSTM directions.
#   gates_x = x @ [W_ih_fwd | W_ih_bwd] + [b_fwd | b_bwd]   (one big MXU matmul)
# ----------------------------------------------------------------------------
def _input_proj_kernel(x_ref, w_ref, b_ref, gf_ref, gb_ref, *, h4):
    g = (
        jnp.dot(
            x_ref[...].astype(jnp.bfloat16),
            w_ref[...],
            preferred_element_type=jnp.float32,
        )
        + b_ref[...]
    )  # (bn, 8H) f32
    gf_ref[...] = g[:, :h4]
    gb_ref[...] = g[:, h4:]


def input_projection(x_flat, w_ih_cat, b_cat, hidden, *, block_n=512):
    """x_flat: (N, D_in) f32; w_ih_cat: (D_in, 8H) bf16; b_cat: (1, 8H) f32."""
    N, D = x_flat.shape
    H4 = 4 * hidden
    bn = _pick_row_block(N, block_n)
    n_pad = _round_up(N, bn)
    x = x_flat if n_pad == N else jnp.pad(x_flat, ((0, n_pad - N), (0, 0)))

    gxf, gxb = pl.pallas_call(
        functools.partial(_input_proj_kernel, h4=H4),
        out_shape=(
            jax.ShapeDtypeStruct((n_pad, H4), jnp.float32),
            jax.ShapeDtypeStruct((n_pad, H4), jnp.float32),
        ),
        grid_spec=pltpu.PrefetchScalarGridSpec(
            num_scalar_prefetch=0,
            grid=(n_pad // bn,),
            in_specs=[
                pl.BlockSpec((bn, D), lambda i: (i, 0)),
                pl.BlockSpec((D, 2 * H4), lambda i: (0, 0)),
                pl.BlockSpec((1, 2 * H4), lambda i: (0, 0)),
            ],
            out_specs=[
                pl.BlockSpec((bn, H4), lambda i: (i, 0)),
                pl.BlockSpec((bn, H4), lambda i: (i, 0)),
            ],
        ),
        compiler_params=pltpu.CompilerParams(
            dimension_semantics=("parallel",)
        ),
    )(x, w_ih_cat, b_cat)

    if n_pad != N:
        gxf, gxb = gxf[:N], gxb[:N]
    return gxf, gxb


# ----------------------------------------------------------------------------
# Kernel 2: fused bidirectional LSTM recurrence (time loop inside the kernel).
# PyTorch gate order: i, f, g, o.  gates = gates_x[t] + h @ W_hh^T (W_hh passed
# already transposed as (H, 4H)); b_ih + b_hh already folded into gates_x.
# ----------------------------------------------------------------------------
def _bilstm_recurrence_kernel(
    gxf_ref, gxb_ref, whh_ref, out_ref,
    houtf, houtb, h_f, c_f, h_b, c_b,
    *, seq_len, hidden,
):
    T, H = seq_len, hidden
    B = h_f.shape[0]
    H4 = 4 * H

    # init states
    h_f[...] = jnp.zeros_like(h_f)
    c_f[...] = jnp.zeros_like(c_f)
    h_b[...] = jnp.zeros_like(h_b)
    c_b[...] = jnp.zeros_like(c_b)

    # recurrent weights loaded once (bf16), outside the loop
    w_hh_f = whh_ref[0]  # (H, 4H)
    w_hh_b = whh_ref[1]  # (H, 4H)

    # lane mask: lanes [2H, 3H) are the 'g' gate (tanh); everything else sigmoid.
    lane = lax.broadcasted_iota(jnp.int32, (B, H4), 1)
    is_g = (lane >= 2 * H) & (lane < 3 * H)

    def cell(gx, h_ref, c_ref, w_hh):
        gates = gx + jnp.dot(
            h_ref[...].astype(jnp.bfloat16), w_hh,
            preferred_element_type=jnp.float32,
        )  # (B, 4H) f32
        # full-width transcendentals (EUP) + blend instead of 4 narrow slices
        act = jnp.where(is_g, jnp.tanh(gates), jax.nn.sigmoid(gates))
        i_g = act[:, 0:H]
        f_g = act[:, H:2 * H]
        g_g = act[:, 2 * H:3 * H]
        o_g = act[:, 3 * H:4 * H]
        c_new = f_g * c_ref[...] + i_g * g_g
        h_new = o_g * jnp.tanh(c_new)
        c_ref[...] = c_new
        h_ref[...] = h_new
        return h_new

    def step(t, carry):
        t_rev = T - 1 - t
        # forward direction consumes time t, backward consumes time T-1-t
        houtf[t] = cell(gxf_ref[t], h_f, c_f, w_hh_f)
        houtb[t_rev] = cell(gxb_ref[t_rev], h_b, c_b, w_hh_b)
        return carry

    lax.fori_loop(0, T, step, 0)

    # single bulk store of the whole layer output (fwd half | bwd half)
    out_ref[:, :, 0:H] = houtf[...]
    out_ref[:, :, H:2 * H] = houtb[...]


def bilstm_layer(x_flat, layer_params, *, T, B, hidden):
    """x_flat: (T*B, D_in) f32, time-major -> (T*B, 2*hidden) f32."""
    H4 = 4 * hidden
    gxf, gxb = input_projection(
        x_flat, layer_params["w_ih"], layer_params["bias"], hidden
    )
    gxf = gxf.reshape(T, B, H4)  # contiguous reshape, no copy at XLA level
    gxb = gxb.reshape(T, B, H4)

    out = pl.pallas_call(
        functools.partial(_bilstm_recurrence_kernel, seq_len=T, hidden=hidden),
        out_shape=jax.ShapeDtypeStruct((T, B, 2 * hidden), jnp.float32),
        grid_spec=pltpu.PrefetchScalarGridSpec(
            num_scalar_prefetch=0,
            grid=(1,),
            in_specs=[
                pl.BlockSpec((T, B, H4), lambda i: (0, 0, 0)),
                pl.BlockSpec((T, B, H4), lambda i: (0, 0, 0)),
                pl.BlockSpec((2, hidden, H4), lambda i: (0, 0, 0)),
            ],
            out_specs=pl.BlockSpec((T, B, 2 * hidden), lambda i: (0, 0, 0)),
            scratch_shapes=[
                pltpu.VMEM((T, B, hidden), jnp.float32),  # houtf
                pltpu.VMEM((T, B, hidden), jnp.float32),  # houtb
                pltpu.VMEM((B, hidden), jnp.float32),     # h_f
                pltpu.VMEM((B, hidden), jnp.float32),     # c_f
                pltpu.VMEM((B, hidden), jnp.float32),     # h_b
                pltpu.VMEM((B, hidden), jnp.float32),     # c_b
            ],
        ),
        compiler_params=pltpu.CompilerParams(
            dimension_semantics=("arbitrary",)
        ),
    )(gxf, gxb, layer_params["w_hh"])

    return out.reshape(T * B, 2 * hidden)


# ----------------------------------------------------------------------------
# Kernel 3: fc1 + log_softmax over the class dim, tiled over N tokens.
# ----------------------------------------------------------------------------
def _fc_logsoftmax_kernel(x_ref, w_ref, b_ref, out_ref):
    logits = (
        jnp.dot(
            x_ref[...].astype(jnp.bfloat16),
            w_ref[...],
            preferred_element_type=jnp.float32,
        )
        + b_ref[...]
    )  # (bn, C) f32
    m = jnp.max(logits, axis=1, keepdims=True)
    shifted = logits - m
    lse = jnp.log(jnp.sum(jnp.exp(shifted), axis=1, keepdims=True))
    out_ref[...] = shifted - lse


def fc_log_softmax(tokens, w_fc, b_fc, *, block_n=512):
    """tokens: (N, 2H) f32; w_fc: (2H, C) bf16; b_fc: (1, C) f32 -> (N, C)."""
    N, D = tokens.shape
    C = w_fc.shape[1]
    bn = _pick_row_block(N, block_n)
    n_pad = _round_up(N, bn)
    x = tokens if n_pad == N else jnp.pad(tokens, ((0, n_pad - N), (0, 0)))

    out = pl.pallas_call(
        _fc_logsoftmax_kernel,
        out_shape=jax.ShapeDtypeStruct((n_pad, C), jnp.float32),
        grid_spec=pltpu.PrefetchScalarGridSpec(
            num_scalar_prefetch=0,
            grid=(n_pad // bn,),
            in_specs=[
                pl.BlockSpec((bn, D), lambda i: (i, 0)),
                pl.BlockSpec((D, C), lambda i: (0, 0)),
                pl.BlockSpec((1, C), lambda i: (0, 0)),
            ],
            out_specs=pl.BlockSpec((bn, C), lambda i: (i, 0)),
        ),
        compiler_params=pltpu.CompilerParams(
            dimension_semantics=("parallel",)
        ),
    )(x, w_fc, b_fc)

    return out if n_pad == N else out[:N]


# ----------------------------------------------------------------------------
# Parameter setup (deterministic, PyTorch-style uniform(-1/sqrt(H), 1/sqrt(H))).
# Weights stored bf16 for the MXU; biases (b_ih + b_hh folded) stay f32.
# ----------------------------------------------------------------------------
def init_params(key, embedding_dim, hidden_dim, lstm_layers, n_classes):
    params = {"lstm": []}
    bound = 1.0 / float(hidden_dim) ** 0.5
    H4 = 4 * hidden_dim
    for layer in range(lstm_layers):
        d_in = embedding_dim if layer == 0 else 2 * hidden_dim
        w_ih_dirs, w_hh_dirs, bias_dirs = [], [], []
        for _direction in range(2):  # fwd, bwd
            key, k1, k2, k3, k4 = jax.random.split(key, 5)
            w_ih = jax.random.uniform(k1, (d_in, H4), jnp.float32, -bound, bound)
            w_hh = jax.random.uniform(k2, (hidden_dim, H4), jnp.float32, -bound, bound)
            b_ih = jax.random.uniform(k3, (H4,), jnp.float32, -bound, bound)
            b_hh = jax.random.uniform(k4, (H4,), jnp.float32, -bound, bound)
            w_ih_dirs.append(w_ih)
            w_hh_dirs.append(w_hh)
            bias_dirs.append(b_ih + b_hh)
        params["lstm"].append({
            # [W_ih_fwd | W_ih_bwd] concatenated along the gate axis -> one matmul
            "w_ih": jnp.concatenate(w_ih_dirs, axis=1).astype(jnp.bfloat16),  # (d_in, 8H)
            "bias": jnp.concatenate(bias_dirs, axis=0).reshape(1, 2 * H4),     # (1, 8H) f32
            "w_hh": jnp.stack(w_hh_dirs, axis=0).astype(jnp.bfloat16),         # (2, H, 4H)
        })
    fc_bound = 1.0 / float(2 * hidden_dim) ** 0.5
    key, k1, k2 = jax.random.split(key, 3)
    params["fc_w"] = jax.random.uniform(
        k1, (2 * hidden_dim, n_classes), jnp.float32, -fc_bound, fc_bound
    ).astype(jnp.bfloat16)
    params["fc_b"] = jax.random.uniform(
        k2, (1, n_classes), jnp.float32, -fc_bound, fc_bound
    )
    return params


# ----------------------------------------------------------------------------
# Forward: packed data (T*B, E) -> log-probs (T*B, n_classes)
# ----------------------------------------------------------------------------
def supervised_model_al_forward(packed_data, params, *, T, B, hidden_dim):
    x = packed_data  # (T*B, E), time-major packed layout, equal-length sequences
    for layer_params in params["lstm"]:
        x = bilstm_layer(x, layer_params, T=T, B=B, hidden=hidden_dim)
        # lstm_dropout between layers: identity in eval-mode forward.
    # output_dropout: identity in eval-mode forward.
    return fc_log_softmax(x, params["fc_w"], params["fc_b"])


if __name__ == "__main__":
    # Small, module-consistent shapes.
    n_classes = 8
    hidden_dim = 32
    lstm_layers = 2
    embedding_dim = 300
    T, B = 8, 2  # sequence length, batch (equal-length packed sequences)

    key = jax.random.PRNGKey(0)
    key, pkey, xkey = jax.random.split(key, 3)
    params = init_params(pkey, embedding_dim, hidden_dim, lstm_layers, n_classes)

    # packed_sents.data: (T*B, embedding_dim), time-major.
    packed_data = jax.random.normal(xkey, (T * B, embedding_dim), jnp.float32)

    fwd = jax.jit(
        functools.partial(
            supervised_model_al_forward, T=T, B=B, hidden_dim=hidden_dim
        )
    )
    out = fwd(packed_data, params)
    out = jax.block_until_ready(out)

    assert out.shape == (T * B, n_classes)
    # Rows of log_softmax must sum to ~1 after exp.
    row_sums = jnp.exp(out).sum(axis=1)
    assert bool(jnp.all(jnp.abs(row_sums - 1.0) < 1e-4))

    print("KERNEL_OK")
</pallas_src>

<mosaic_0001>
module attributes {stable_mosaic.version = 11 : i64} {
  func.func @_input_proj_kernel(%arg0: i32, %arg1: memref<16x64xf32, #tpu.memory_space<vmem>>, %arg2: memref<64x256xbf16, #tpu.memory_space<vmem>>, %arg3: memref<1x256xf32, #tpu.memory_space<vmem>>, %arg4: memref<16x128xf32, #tpu.memory_space<vmem>>, %arg5: memref<16x128xf32, #tpu.memory_space<vmem>>) attributes {dimension_semantics = [#tpu.dimension_semantics<parallel>], iteration_bounds = array<i64: 1>, scalar_prefetch = 0 : i64, scratch_operands = 0 : i64, tpu.core_type = #tpu.core_type<tc>, window_params = [{transform_indices = @transform_0, window_bounds = array<i64: 16, 64>}, {pipeline_mode = #tpu.pipeline_mode<synchronous>, transform_indices = @transform_1, window_bounds = array<i64: 64, 256>}, {pipeline_mode = #tpu.pipeline_mode<synchronous>, transform_indices = @transform_2, window_bounds = array<i64: 1, 256>}, {transform_indices = @transform_3, window_bounds = array<i64: 16, 128>}, {transform_indices = @transform_4, window_bounds = array<i64: 16, 128>}]} {
    %c0 = arith.constant 0 : index
    %c0_0 = arith.constant 0 : index
    %0 = vector.load %arg1[%c0, %c0_0] : memref<16x64xf32, #tpu.memory_space<vmem>>, vector<16x64xf32>
    %1 = arith.truncf %0 : vector<16x64xf32> to vector<16x64xbf16>
    %c0_1 = arith.constant 0 : index
    %c0_2 = arith.constant 0 : index
    %2 = vector.load %arg2[%c0_1, %c0_2] : memref<64x256xbf16, #tpu.memory_space<vmem>>, vector<64x256xbf16>
    %cst = arith.constant dense<0.000000e+00> : vector<16x256xf32>
    %3 = tpu.matmul %1, %2, %cst {dimension_numbers = #tpu.dot_dimension_numbers<[1], [0], [0], [1], [0, 0, 1, 1], [], []>} : vector<16x64xbf16>, vector<64x256xbf16>, vector<16x256xf32> -> vector<16x256xf32>
    %c0_3 = arith.constant 0 : index
    %c0_4 = arith.constant 0 : index
    %4 = vector.load %arg3[%c0_3, %c0_4] : memref<1x256xf32, #tpu.memory_space<vmem>>, vector<1x256xf32>
    %5 = vector.broadcast %4 : vector<1x256xf32> to vector<16x256xf32>
    %6 = arith.addf %3, %5 : vector<16x256xf32>
    %7 = vector.extract_strided_slice %6 {offsets = [0, 0], sizes = [16, 128], strides = [1, 1]} : vector<16x256xf32> to vector<16x128xf32>
    %c0_5 = arith.constant 0 : index
    %c0_6 = arith.constant 0 : index
    %8 = vector.load %arg4[%c0_5, %c0_6] : memref<16x128xf32, #tpu.memory_space<vmem>>, vector<16x128xf32>
    tpu.vector_store %arg4[%c0_5, %c0_6], %7 {strides = array<i32>} : memref<16x128xf32, #tpu.memory_space<vmem>>, vector<16x128xf32>,
    %9 = vector.extract_strided_slice %6 {offsets = [0, 128], sizes = [16, 128], strides = [1, 1]} : vector<16x256xf32> to vector<16x128xf32>
    %c0_7 = arith.constant 0 : index
    %c0_8 = arith.constant 0 : index
    %10 = vector.load %arg5[%c0_7, %c0_8] : memref<16x128xf32, #tpu.memory_space<vmem>>, vector<16x128xf32>
    tpu.vector_store %arg5[%c0_7, %c0_8], %9 {strides = array<i32>} : memref<16x128xf32, #tpu.memory_space<vmem>>, vector<16x128xf32>,
    return
  }
  func.func @transform_0(%arg0: i32) -> (i32, i32) {
    %c0_i32 = arith.constant 0 : i32
    %c0_i32_0 = arith.constant 0 : i32
    return %arg0, %c0_i32 : i32, i32
  }
  func.func @transform_1(%arg0: i32) -> (i32, i32) {
    %c0_i32 = arith.constant 0 : i32
    %c0_i32_0 = arith.constant 0 : i32
    %c0_i32_1 = arith.constant 0 : i32
    return %c0_i32, %c0_i32_0 : i32, i32
  }
  func.func @transform_2(%arg0: i32) -> (i32, i32) {
    %c0_i32 = arith.constant 0 : i32
    %c0_i32_0 = arith.constant 0 : i32
    %c0_i32_1 = arith.constant 0 : i32
    return %c0_i32, %c0_i32_0 : i32, i32
  }
  func.func @transform_3(%arg0: i32) -> (i32, i32) {
    %c0_i32 = arith.constant 0 : i32
    %c0_i32_0 = arith.constant 0 : i32
    return %arg0, %c0_i32 : i32, i32
  }
  func.func @transform_4(%arg0: i32) -> (i32, i32) {
    %c0_i32 = arith.constant 0 : i32
    %c0_i32_0 = arith.constant 0 : i32
    return %arg0, %c0_i32 : i32, i32
  }
}

module attributes {stable_mosaic.version = 11 : i64} {
  func.func @_bilstm_recurrence_kernel(%arg0: i32, %arg1: memref<8x2x128xf32, #tpu.memory_space<vmem>>, %arg2: memref<8x2x128xf32, #tpu.memory_space<vmem>>, %arg3: memref<2x32x128xbf16, #tpu.memory_space<vmem>>, %arg4: memref<8x2x64xf32, #tpu.memory_space<vmem>>, %arg5: memref<8x2x32xf32, #tpu.memory_space<vmem>>, %arg6: memref<8x2x32xf32, #tpu.memory_space<vmem>>, %arg7: memref<2x32xf32, #tpu.memory_space<vmem>>, %arg8: memref<2x32xf32, #tpu.memory_space<vmem>>, %arg9: memref<2x32xf32, #tpu.memory_space<vmem>>, %arg10: memref<2x32xf32, #tpu.memory_space<vmem>>) attributes {dimension_semantics = [#tpu.dimension_semantics<arbitrary>], iteration_bounds = array<i64: 1>, scalar_prefetch = 0 : i64, scratch_operands = 6 : i64, tpu.core_type = #tpu.core_type<tc>, window_params = [{pipeline_mode = #tpu.pipeline_mode<synchronous>, transform_indices = @transform_0, window_bounds = array<i64: 8, 2, 128>}, {pipeline_mode = #tpu.pipeline_mode<synchronous>, transform_indices = @transform_1, window_bounds = array<i64: 8, 2, 128>}, {pipeline_mode = #tpu.pipeline_mode<synchronous>, transform_indices = @transform_2, window_bounds = array<i64: 2, 32, 128>}, {pipeline_mode = #tpu.pipeline_mode<synchronous>, transform_indices = @transform_3, window_bounds = array<i64: 8, 2, 64>}]} {
    %cst = arith.constant 0.000000e+00 : f32
    %0 = vector.broadcast %cst : f32 to vector<2x32xf32>
    %c0 = arith.constant 0 : index
    %c0_0 = arith.constant 0 : index
    %1 = vector.load %arg7[%c0, %c0_0] : memref<2x32xf32, #tpu.memory_space<vmem>>, vector<2x32xf32>
    tpu.vector_store %arg7[%c0, %c0_0], %0 {strides = array<i32>} : memref<2x32xf32, #tpu.memory_space<vmem>>, vector<2x32xf32>,
    %cst_1 = arith.constant 0.000000e+00 : f32
    %2 = vector.broadcast %cst_1 : f32 to vector<2x32xf32>
    %c0_2 = arith.constant 0 : index
    %c0_3 = arith.constant 0 : index
    %3 = vector.load %arg8[%c0_2, %c0_3] : memref<2x32xf32, #tpu.memory_space<vmem>>, vector<2x32xf32>
    tpu.vector_store %arg8[%c0_2, %c0_3], %2 {strides = array<i32>} : memref<2x32xf32, #tpu.memory_space<vmem>>, vector<2x32xf32>,
    %cst_4 = arith.constant 0.000000e+00 : f32
    %4 = vector.broadcast %cst_4 : f32 to vector<2x32xf32>
    %c0_5 = arith.constant 0 : index
    %c0_6 = arith.constant 0 : index
    %5 = vector.load %arg9[%c0_5, %c0_6] : memref<2x32xf32, #tpu.memory_space<vmem>>, vector<2x32xf32>
    tpu.vector_store %arg9[%c0_5, %c0_6], %4 {strides = array<i32>} : memref<2x32xf32, #tpu.memory_space<vmem>>, vector<2x32xf32>,
    %cst_7 = arith.constant 0.000000e+00 : f32
    %6 = vector.broadcast %cst_7 : f32 to vector<2x32xf32>
    %c0_8 = arith.constant 0 : index
    %c0_9 = arith.constant 0 : index
    %7 = vector.load %arg10[%c0_8, %c0_9] : memref<2x32xf32, #tpu.memory_space<vmem>>, vector<2x32xf32>
    tpu.vector_store %arg10[%c0_8, %c0_9], %6 {strides = array<i32>} : memref<2x32xf32, #tpu.memory_space<vmem>>, vector<2x32xf32>,
    %c0_10 = arith.constant 0 : index
    %c0_11 = arith.constant 0 : index
    %c0_12 = arith.constant 0 : index
    %8 = vector.load %arg3[%c0_10, %c0_11, %c0_12] : memref<2x32x128xbf16, #tpu.memory_space<vmem>>, vector<1x32x128xbf16>
    %9 = vector.shape_cast %8 : vector<1x32x128xbf16> to vector<32x128xbf16>
    %c1 = arith.constant 1 : index
    %c0_13 = arith.constant 0 : index
    %c0_14 = arith.constant 0 : index
    %10 = vector.load %arg3[%c1, %c0_13, %c0_14] : memref<2x32x128xbf16, #tpu.memory_space<vmem>>, vector<1x32x128xbf16>
    %11 = vector.shape_cast %10 : vector<1x32x128xbf16> to vector<32x128xbf16>
    %12 = tpu.iota {dimensions = array<i32: 1>} : vector<2x128xi32>
    %c64_i32 = arith.constant 64 : i32
    %13 = vector.broadcast %c64_i32 : i32 to vector<2x128xi32>
    %14 = arith.cmpi sge, %12, %13 : vector<2x128xi32>
    %c96_i32 = arith.constant 96 : i32
    %15 = vector.broadcast %c96_i32 : i32 to vector<2x128xi32>
    %16 = arith.cmpi slt, %12, %15 : vector<2x128xi32>
    %17 = arith.andi %14, %16 : vector<2x128xi1>
    %c0_i32 = arith.constant 0 : i32
    %c8_i32 = arith.constant 8 : i32
    %18 = arith.addi %c0_i32, %c8_i32 : i32
    %c1_i32 = arith.constant 1 : i32
    scf.for %arg11 = %c0_i32 to %18 step %c1_i32  : i32 {
      %c7_i32 = arith.constant 7 : i32
      %23 = arith.subi %c7_i32, %arg11 : i32
      %24 = arith.index_cast %arg11 : i32 to index
      %c0_27 = arith.constant 0 : index
      %c0_28 = arith.constant 0 : index
      %25 = vector.load %arg1[%24, %c0_27, %c0_28] : memref<8x2x128xf32, #tpu.memory_space<vmem>>, vector<1x2x128xf32>
      %26 = vector.shape_cast %25 : vector<1x2x128xf32> to vector<2x128xf32>
      %c0_29 = arith.constant 0 : index
      %c0_30 = arith.constant 0 : index
      %27 = vector.load %arg7[%c0_29, %c0_30] : memref<2x32xf32, #tpu.memory_space<vmem>>, vector<2x32xf32>
      %28 = arith.truncf %27 : vector<2x32xf32> to vector<2x32xbf16>
      %cst_31 = arith.constant dense<0.000000e+00> : vector<2x128xf32>
      %29 = tpu.matmul %28, %9, %cst_31 {dimension_numbers = #tpu.dot_dimension_numbers<[1], [0], [0], [1], [0, 0, 1, 1], [], []>} : vector<2x32xbf16>, vector<32x128xbf16>, vector<2x128xf32> -> vector<2x128xf32>
      %30 = arith.addf %26, %29 : vector<2x128xf32>
      %31 = math.tanh %30 : vector<2x128xf32>
      %32 = arith.negf %30 : vector<2x128xf32>
      %33 = math.exp %32 : vector<2x128xf32>
      %cst_32 = arith.constant 1.000000e+00 : f32
      %34 = vector.broadcast %cst_32 : f32 to vector<2x128xf32>
      %35 = arith.addf %34, %33 : vector<2x128xf32>
      %36 = arith.divf %34, %35 : vector<2x128xf32>
      %37 = arith.select %17, %31, %36 : vector<2x128xi1>, vector<2x128xf32>
      %38 = vector.extract_strided_slice %37 {offsets = [0, 0], sizes = [2, 32], strides = [1, 1]} : vector<2x128xf32> to vector<2x32xf32>
      %39 = vector.extract_strided_slice %37 {offsets = [0, 32], sizes = [2, 32], strides = [1, 1]} : vector<2x128xf32> to vector<2x32xf32>
      %40 = vector.extract_strided_slice %37 {offsets = [0, 64], sizes = [2, 32], strides = [1, 1]} : vector<2x128xf32> to vector<2x32xf32>
      %41 = vector.extract_strided_slice %37 {offsets = [0, 96], sizes = [2, 32], strides = [1, 1]} : vector<2x128xf32> to vector<2x32xf32>
      %c0_33 = arith.constant 0 : index
      %c0_34 = arith.constant 0 : index
      %42 = vector.load %arg8[%c0_33, %c0_34] : memref<2x32xf32, #tpu.memory_space<vmem>>, vector<2x32xf32>
      %43 = arith.mulf %39, %42 : vector<2x32xf32>
      %44 = arith.mulf %38, %40 : vector<2x32xf32>
      %45 = arith.addf %43, %44 : vector<2x32xf32>
      %46 = math.tanh %45 : vector<2x32xf32>
      %47 = arith.mulf %41, %46 : vector<2x32xf32>
      %c0_35 = arith.constant 0 : index
      %c0_36 = arith.constant 0 : index
      %48 = vector.load %arg8[%c0_35, %c0_36] : memref<2x32xf32, #tpu.memory_space<vmem>>, vector<2x32xf32>
      tpu.vector_store %arg8[%c0_35, %c0_36], %45 {strides = array<i32>} : memref<2x32xf32, #tpu.memory_space<vmem>>, vector<2x32xf32>,
      %c0_37 = arith.constant 0 : index
      %c0_38 = arith.constant 0 : index
      %49 = vector.load %arg7[%c0_37, %c0_38] : memref<2x32xf32, #tpu.memory_space<vmem>>, vector<2x32xf32>
      tpu.vector_store %arg7[%c0_37, %c0_38], %47 {strides = array<i32>} : memref<2x32xf32, #tpu.memory_space<vmem>>, vector<2x32xf32>,
      %50 = arith.index_cast %arg11 : i32 to index
      %c0_39 = arith.constant 0 : index
      %c0_40 = arith.constant 0 : index
      %51 = vector.load %arg5[%50, %c0_39, %c0_40] : memref<8x2x32xf32, #tpu.memory_space<vmem>>, vector<1x2x32xf32>
      %52 = vector.shape_cast %51 : vector<1x2x32xf32> to vector<2x32xf32>
      %53 = vector.shape_cast %47 : vector<2x32xf32> to vector<1x2x32xf32>
      tpu.vector_store %arg5[%50, %c0_39, %c0_40], %53 {strides = array<i32>} : memref<8x2x32xf32, #tpu.memory_space<vmem>>, vector<1x2x32xf32>,
      %54 = arith.index_cast %23 : i32 to index
      %c0_41 = arith.constant 0 : index
      %c0_42 = arith.constant 0 : index
      %55 = vector.load %arg2[%54, %c0_41, %c0_42] : memref<8x2x128xf32, #tpu.memory_space<vmem>>, vector<1x2x128xf32>
      %56 = vector.shape_cast %55 : vector<1x2x128xf32> to vector<2x128xf32>
      %c0_43 = arith.constant 0 : index
      %c0_44 = arith.constant 0 : index
      %57 = vector.load %arg9[%c0_43, %c0_44] : memref<2x32xf32, #tpu.memory_space<vmem>>, vector<2x32xf32>
      %58 = arith.truncf %57 : vector<2x32xf32> to vector<2x32xbf16>
      %cst_45 = arith.constant dense<0.000000e+00> : vector<2x128xf32>
      %59 = tpu.matmul %58, %11, %cst_45 {dimension_numbers = #tpu.dot_dimension_numbers<[1], [0], [0], [1], [0, 0, 1, 1], [], []>} : vector<2x32xbf16>, vector<32x128xbf16>, vector<2x128xf32> -> vector<2x128xf32>
      %60 = arith.addf %56, %59 : vector<2x128xf32>
      %61 = math.tanh %60 : vector<2x128xf32>
      %62 = arith.negf %60 : vector<2x128xf32>
      %63 = math.exp %62 : vector<2x128xf32>
      %cst_46 = arith.constant 1.000000e+00 : f32
      %64 = vector.broadcast %cst_46 : f32 to vector<2x128xf32>
      %65 = arith.addf %64, %63 : vector<2x128xf32>
      %66 = arith.divf %64, %65 : vector<2x128xf32>
      %67 = arith.select %17, %61, %66 : vector<2x128xi1>, vector<2x128xf32>
      %68 = vector.extract_strided_slice %67 {offsets = [0, 0], sizes = [2, 32], strides = [1, 1]} : vector<2x128xf32> to vector<2x32xf32>
      %69 = vector.extract_strided_slice %67 {offsets = [0, 32], sizes = [2, 32], strides = [1, 1]} : vector<2x128xf32> to vector<2x32xf32>
      %70 = vector.extract_strided_slice %67 {offsets = [0, 64], sizes = [2, 32], strides = [1, 1]} : vector<2x128xf32> to vector<2x32xf32>
      %71 = vector.extract_strided_slice %67 {offsets = [0, 96], sizes = [2, 32], strides = [1, 1]} : vector<2x128xf32> to vector<2x32xf32>
      %c0_47 = arith.constant 0 : index
      %c0_48 = arith.constant 0 : index
      %72 = vector.load %arg10[%c0_47, %c0_48] : memref<2x32xf32, #tpu.memory_space<vmem>>, vector<2x32xf32>
      %73 = arith.mulf %69, %72 : vector<2x32xf32>
      %74 = arith.mulf %68, %70 : vector<2x32xf32>
      %75 = arith.addf %73, %74 : vector<2x32xf32>
      %76 = math.tanh %75 : vector<2x32xf32>
      %77 = arith.mulf %71, %76 : vector<2x32xf32>
      %c0_49 = arith.constant 0 : index
      %c0_50 = arith.constant 0 : index
      %78 = vector.load %arg10[%c0_49, %c0_50] : memref<2x32xf32, #tpu.memory_space<vmem>>, vector<2x32xf32>
      tpu.vector_store %arg10[%c0_49, %c0_50], %75 {strides = array<i32>} : memref<2x32xf32, #tpu.memory_space<vmem>>, vector<2x32xf32>,
      %c0_51 = arith.constant 0 : index
      %c0_52 = arith.constant 0 : index
      %79 = vector.load %arg9[%c0_51, %c0_52] : memref<2x32xf32, #tpu.memory_space<vmem>>, vector<2x32xf32>
      tpu.vector_store %arg9[%c0_51, %c0_52], %77 {strides = array<i32>} : memref<2x32xf32, #tpu.memory_space<vmem>>, vector<2x32xf32>,
      %80 = arith.index_cast %23 : i32 to index
      %c0_53 = arith.constant 0 : index
      %c0_54 = arith.constant 0 : index
      %81 = vector.load %arg6[%80, %c0_53, %c0_54] : memref<8x2x32xf32, #tpu.memory_space<vmem>>, vector<1x2x32xf32>
      %82 = vector.shape_cast %81 : vector<1x2x32xf32> to vector<2x32xf32>
      %83 = vector.shape_cast %77 : vector<2x32xf32> to vector<1x2x32xf32>
      tpu.vector_store %arg6[%80, %c0_53, %c0_54], %83 {strides = array<i32>} : memref<8x2x32xf32, #tpu.memory_space<vmem>>, vector<1x2x32xf32>,
    }
    %c8_i32_15 = arith.constant 8 : i32
    %c0_16 = arith.constant 0 : index
    %c0_17 = arith.constant 0 : index
    %c0_18 = arith.constant 0 : index
    %19 = vector.load %arg5[%c0_16, %c0_17, %c0_18] : memref<8x2x32xf32, #tpu.memory_space<vmem>>, vector<8x2x32xf32>
    %c0_19 = arith.constant 0 : index
    %c0_20 = arith.constant 0 : index
    %c0_21 = arith.constant 0 : index
    %20 = vector.load %arg4[%c0_19, %c0_20, %c0_21] : memref<8x2x64xf32, #tpu.memory_space<vmem>>, vector<8x2x32xf32>
    tpu.vector_store %arg4[%c0_19, %c0_20, %c0_21], %19 {strides = array<i32>} : memref<8x2x64xf32, #tpu.memory_space<vmem>>, vector<8x2x32xf32>,
    %c0_22 = arith.constant 0 : index
    %c0_23 = arith.constant 0 : index
    %c0_24 = arith.constant 0 : index
    %21 = vector.load %arg6[%c0_22, %c0_23, %c0_24] : memref<8x2x32xf32, #tpu.memory_space<vmem>>, vector<8x2x32xf32>
    %c0_25 = arith.constant 0 : index
    %c0_26 = arith.constant 0 : index
    %c32 = arith.constant 32 : index
    %22 = vector.load %arg4[%c0_25, %c0_26, %c32] : memref<8x2x64xf32, #tpu.memory_space<vmem>>, vector<8x2x32xf32>
    tpu.vector_store %arg4[%c0_25, %c0_26, %c32], %21 {strides = array<i32>} : memref<8x2x64xf32, #tpu.memory_space<vmem>>, vector<8x2x32xf32>,
    return
  }
  func.func @transform_0(%arg0: i32) -> (i32, i32, i32) {
    %c0_i32 = arith.constant 0 : i32
    %c0_i32_0 = arith.constant 0 : i32
    %c0_i32_1 = arith.constant 0 : i32
    %c0_i32_2 = arith.constant 0 : i32
    return %c0_i32, %c0_i32_0, %c0_i32_1 : i32, i32, i32
  }
  func.func @transform_1(%arg0: i32) -> (i32, i32, i32) {
    %c0_i32 = arith.constant 0 : i32
    %c0_i32_0 = arith.constant 0 : i32
    %c0_i32_1 = arith.constant 0 : i32
    %c0_i32_2 = arith.constant 0 : i32
    return %c0_i32, %c0_i32_0, %c0_i32_1 : i32, i32, i32
  }
  func.func @transform_2(%arg0: i32) -> (i32, i32, i32) {
    %c0_i32 = arith.constant 0 : i32
    %c0_i32_0 = arith.constant 0 : i32
    %c0_i32_1 = arith.constant 0 : i32
    %c0_i32_2 = arith.constant 0 : i32
    return %c0_i32, %c0_i32_0, %c0_i32_1 : i32, i32, i32
  }
  func.func @transform_3(%arg0: i32) -> (i32, i32, i32) {
    %c0_i32 = arith.constant 0 : i32
    %c0_i32_0 = arith.constant 0 : i32
    %c0_i32_1 = arith.constant 0 : i32
    %c0_i32_2 = arith.constant 0 : i32
    return %c0_i32, %c0_i32_0, %c0_i32_1 : i32, i32, i32
  }
}

module attributes {stable_mosaic.version = 11 : i64} {
  func.func @_input_proj_kernel(%arg0: i32, %arg1: memref<16x300xf32, #tpu.memory_space<vmem>>, %arg2: memref<300x256xbf16, #tpu.memory_space<vmem>>, %arg3: memref<1x256xf32, #tpu.memory_space<vmem>>, %arg4: memref<16x128xf32, #tpu.memory_space<vmem>>, %arg5: memref<16x128xf32, #tpu.memory_space<vmem>>) attributes {dimension_semantics = [#tpu.dimension_semantics<parallel>], iteration_bounds = array<i64: 1>, scalar_prefetch = 0 : i64, scratch_operands = 0 : i64, tpu.core_type = #tpu.core_type<tc>, window_params = [{transform_indices = @transform_0, window_bounds = array<i64: 16, 300>}, {pipeline_mode = #tpu.pipeline_mode<synchronous>, transform_indices = @transform_1, window_bounds = array<i64: 300, 256>}, {pipeline_mode = #tpu.pipeline_mode<synchronous>, transform_indices = @transform_2, window_bounds = array<i64: 1, 256>}, {transform_indices = @transform_3, window_bounds = array<i64: 16, 128>}, {transform_indices = @transform_4, window_bounds = array<i64: 16, 128>}]} {
    %c0 = arith.constant 0 : index
    %c0_0 = arith.constant 0 : index
    %0 = vector.load %arg1[%c0, %c0_0] : memref<16x300xf32, #tpu.memory_space<vmem>>, vector<16x300xf32>
    %1 = arith.truncf %0 : vector<16x300xf32> to vector<16x300xbf16>
    %c0_1 = arith.constant 0 : index
    %c0_2 = arith.constant 0 : index
    %2 = vector.load %arg2[%c0_1, %c0_2] : memref<300x256xbf16, #tpu.memory_space<vmem>>, vector<300x256xbf16>
    %cst = arith.constant dense<0.000000e+00> : vector<16x256xf32>
    %3 = tpu.matmul %1, %2, %cst {dimension_numbers = #tpu.dot_dimension_numbers<[1], [0], [0], [1], [0, 0, 1, 1], [], []>} : vector<16x300xbf16>, vector<300x256xbf16>, vector<16x256xf32> -> vector<16x256xf32>
    %c0_3 = arith.constant 0 : index
    %c0_4 = arith.constant 0 : index
    %4 = vector.load %arg3[%c0_3, %c0_4] : memref<1x256xf32, #tpu.memory_space<vmem>>, vector<1x256xf32>
    %5 = vector.broadcast %4 : vector<1x256xf32> to vector<16x256xf32>
    %6 = arith.addf %3, %5 : vector<16x256xf32>
    %7 = vector.extract_strided_slice %6 {offsets = [0, 0], sizes = [16, 128], strides = [1, 1]} : vector<16x256xf32> to vector<16x128xf32>
    %c0_5 = arith.constant 0 : index
    %c0_6 = arith.constant 0 : index
    %8 = vector.load %arg4[%c0_5, %c0_6] : memref<16x128xf32, #tpu.memory_space<vmem>>, vector<16x128xf32>
    tpu.vector_store %arg4[%c0_5, %c0_6], %7 {strides = array<i32>} : memref<16x128xf32, #tpu.memory_space<vmem>>, vector<16x128xf32>,
    %9 = vector.extract_strided_slice %6 {offsets = [0, 128], sizes = [16, 128], strides = [1, 1]} : vector<16x256xf32> to vector<16x128xf32>
    %c0_7 = arith.constant 0 : index
    %c0_8 = arith.constant 0 : index
    %10 = vector.load %arg5[%c0_7, %c0_8] : memref<16x128xf32, #tpu.memory_space<vmem>>, vector<16x128xf32>
    tpu.vector_store %arg5[%c0_7, %c0_8], %9 {strides = array<i32>} : memref<16x128xf32, #tpu.memory_space<vmem>>, vector<16x128xf32>,
    return
  }
  func.func @transform_0(%arg0: i32) -> (i32, i32) {
    %c0_i32 = arith.constant 0 : i32
    %c0_i32_0 = arith.constant 0 : i32
    return %arg0, %c0_i32 : i32, i32
  }
  func.func @transform_1(%arg0: i32) -> (i32, i32) {
    %c0_i32 = arith.constant 0 : i32
    %c0_i32_0 = arith.constant 0 : i32
    %c0_i32_1 = arith.constant 0 : i32
    return %c0_i32, %c0_i32_0 : i32, i32
  }
  func.func @transform_2(%arg0: i32) -> (i32, i32) {
    %c0_i32 = arith.constant 0 : i32
    %c0_i32_0 = arith.constant 0 : i32
    %c0_i32_1 = arith.constant 0 : i32
    return %c0_i32, %c0_i32_0 : i32, i32
  }
  func.func @transform_3(%arg0: i32) -> (i32, i32) {
    %c0_i32 = arith.constant 0 : i32
    %c0_i32_0 = arith.constant 0 : i32
    return %arg0, %c0_i32 : i32, i32
  }
  func.func @transform_4(%arg0: i32) -> (i32, i32) {
    %c0_i32 = arith.constant 0 : i32
    %c0_i32_0 = arith.constant 0 : i32
    return %arg0, %c0_i32 : i32, i32
  }
}

module attributes {stable_mosaic.version = 11 : i64} {
  func.func @_fc_logsoftmax_kernel(%arg0: i32, %arg1: memref<16x64xf32, #tpu.memory_space<vmem>>, %arg2: memref<64x8xbf16, #tpu.memory_space<vmem>>, %arg3: memref<1x8xf32, #tpu.memory_space<vmem>>, %arg4: memref<16x8xf32, #tpu.memory_space<vmem>>) attributes {dimension_semantics = [#tpu.dimension_semantics<parallel>], iteration_bounds = array<i64: 1>, scalar_prefetch = 0 : i64, scratch_operands = 0 : i64, tpu.core_type = #tpu.core_type<tc>, window_params = [{transform_indices = @transform_0, window_bounds = array<i64: 16, 64>}, {pipeline_mode = #tpu.pipeline_mode<synchronous>, transform_indices = @transform_1, window_bounds = array<i64: 64, 8>}, {pipeline_mode = #tpu.pipeline_mode<synchronous>, transform_indices = @transform_2, window_bounds = array<i64: 1, 8>}, {transform_indices = @transform_3, window_bounds = array<i64: 16, 8>}]} {
    %c0 = arith.constant 0 : index
    %c0_0 = arith.constant 0 : index
    %0 = vector.load %arg1[%c0, %c0_0] : memref<16x64xf32, #tpu.memory_space<vmem>>, vector<16x64xf32>
    %1 = arith.truncf %0 : vector<16x64xf32> to vector<16x64xbf16>
    %c0_1 = arith.constant 0 : index
    %c0_2 = arith.constant 0 : index
    %2 = vector.load %arg2[%c0_1, %c0_2] : memref<64x8xbf16, #tpu.memory_space<vmem>>, vector<64x8xbf16>
    %cst = arith.constant dense<0.000000e+00> : vector<16x8xf32>
    %3 = tpu.matmul %1, %2, %cst {dimension_numbers = #tpu.dot_dimension_numbers<[1], [0], [0], [1], [0, 0, 1, 1], [], []>} : vector<16x64xbf16>, vector<64x8xbf16>, vector<16x8xf32> -> vector<16x8xf32>
    %c0_3 = arith.constant 0 : index
    %c0_4 = arith.constant 0 : index
    %4 = vector.load %arg3[%c0_3, %c0_4] : memref<1x8xf32, #tpu.memory_space<vmem>>, vector<1x8xf32>
    %5 = vector.broadcast %4 : vector<1x8xf32> to vector<16x8xf32>
    %6 = arith.addf %3, %5 : vector<16x8xf32>
    %cst_5 = arith.constant dense<0xFF800000> : vector<16xf32>
    %7 = vector.multi_reduction <maximumf>, %6, %cst_5 [1] : vector<16x8xf32> to vector<16xf32>
    %8 = vector.shape_cast %7 : vector<16xf32> to vector<16x1xf32>
    %9 = vector.broadcast %8 : vector<16x1xf32> to vector<16x8xf32>
    %10 = arith.subf %6, %9 : vector<16x8xf32>
    %11 = math.exp %10 : vector<16x8xf32>
    %cst_6 = arith.constant dense<0.000000e+00> : vector<16xf32>
    %12 = vector.multi_reduction <add>, %11, %cst_6 [1] : vector<16x8xf32> to vector<16xf32>
    %13 = vector.shape_cast %12 : vector<16xf32> to vector<16x1xf32>
    %14 = math.log %13 : vector<16x1xf32>
    %15 = vector.broadcast %14 : vector<16x1xf32> to vector<16x8xf32>
    %16 = arith.subf %10, %15 : vector<16x8xf32>
    %c0_7 = arith.constant 0 : index
    %c0_8 = arith.constant 0 : index
    %17 = vector.load %arg4[%c0_7, %c0_8] : memref<16x8xf32, #tpu.memory_space<vmem>>, vector<16x8xf32>
    tpu.vector_store %arg4[%c0_7, %c0_8], %16 {strides = array<i32>} : memref<16x8xf32, #tpu.memory_space<vmem>>, vector<16x8xf32>,
    return
  }
  func.func @transform_0(%arg0: i32) -> (i32, i32) {
    %c0_i32 = arith.constant 0 : i32
    %c0_i32_0 = arith.constant 0 : i32
    return %arg0, %c0_i32 : i32, i32
  }
  func.func @transform_1(%arg0: i32) -> (i32, i32) {
    %c0_i32 = arith.constant 0 : i32
    %c0_i32_0 = arith.constant 0 : i32
    %c0_i32_1 = arith.constant 0 : i32
    return %c0_i32, %c0_i32_0 : i32, i32
  }
  func.func @transform_2(%arg0: i32) -> (i32, i32) {
    %c0_i32 = arith.constant 0 : i32
    %c0_i32_0 = arith.constant 0 : i32
    %c0_i32_1 = arith.constant 0 : i32
    return %c0_i32, %c0_i32_0 : i32, i32
  }
  func.func @transform_3(%arg0: i32) -> (i32, i32) {
    %c0_i32 = arith.constant 0 : i32
    %c0_i32_0 = arith.constant 0 : i32
    return %arg0, %c0_i32 : i32, i32
  }
}

</mosaic_0001>

<llo_original>
// kernel: supervised_model_al_forward.7
$region0: #{supervised_model_al_forward.7}
  #allocation0 [shape = 'u32[]', space=smem, size = 0x4, offset = 0x4, fixed_abs, tag = 'smem constant byte address 0x4 - core index']
  #allocation1 [shape = 'u32[144,128]{1,0:T(1,128)}', space=vmem, size = 0x12000, scoped, tag = 'internal scratch']
  %s0 = inlined_call_operand.vmem [shape: f32[16,64], index: 0, kind: input, shape index: {}]
  %s1 = inlined_call_operand.vmem [shape: bf16[64,256], index: 1, kind: input, shape index: {}]
  %s2 = inlined_call_operand.vmem [shape: f32[1,256], index: 2, kind: input, shape index: {}]
  %s3 = inlined_call_operand.vmem [shape: f32[16,128], index: 3, kind: output, shape index: {0}]
  %s4 = inlined_call_operand.vmem [shape: f32[16,128], index: 4, kind: output, shape index: {1}]
  %5 = xla_tuple %s3, %s4
  %s6 = sld [smem:[#allocation0]]
  $region30: #{supervised_model_al_forward.7} parent=0
    _
  %s8 = ssub.s32 1, %s6
  %s9 = scalar_select 0, %s8, %s6
  // Predicated region
  $region2: #{supervised_model_al_forward.7} parent=0 // pred_check
    _
  $region3: #{supervised_model_al_forward.7} parent=0 // pred_check_branch
    %11 = sbr.rel (0) target = $region5
  $region4: #{supervised_model_al_forward.7} parent=0 // pred_region
    _
  $region5: #{supervised_model_al_forward.7} parent=0 // pred_fallthru
    _
  // Predicated region
  $region6: #{supervised_model_al_forward.7} parent=0 // pred_check
    _
  $region7: #{supervised_model_al_forward.7} parent=0 // pred_check_branch
    %13 = sbr.rel (0) target = $region9
  $region8: #{supervised_model_al_forward.7} parent=0 // pred_region
    _
  $region9: #{supervised_model_al_forward.7} parent=0 // pred_fallthru
    _
  // Predicated region
  $region10: #{supervised_model_al_forward.7} parent=0 // pred_check
    _
  $region11: #{supervised_model_al_forward.7} parent=0 // pred_check_branch
    %15 = sbr.rel (0) target = $region13
  $region12: #{supervised_model_al_forward.7} parent=0 // pred_region
    _
  $region13: #{supervised_model_al_forward.7} parent=0 // pred_fallthru
    _
  %v17 = vld [vmem:[%s0] sm:$0xff]
  %v18 = vld [vmem:[%s0 + $0x8] sm:$0xff]
  %v19 = vpack.c.bf16 %v18, %v17
  %v20 = vld [vmem:[%s1] sm:$0xff]
  %v21 = vld [vmem:[%s1 + $0x8] sm:$0xff]
  %v22 = vld [vmem:[%s1 + $0x10] sm:$0xff]
  %v23 = vld [vmem:[%s1 + $0x18] sm:$0xff]
  %v24 = vld [vmem:[%s1 + $0x20] sm:$0xff]
  %v25 = vld [vmem:[%s1 + $0x28] sm:$0xff]
  %v26 = vld [vmem:[%s1 + $0x30] sm:$0xff]
  %v27 = vld [vmem:[%s1 + $0x38] sm:$0xff]
  %v28 = vld [vmem:[%s2] sm:$0x3]
  %v30 = vlaneseq
  %v31 = vshrl.u32 %v30, 7
  %v32 = vsub.s32 0, %v31
  %v33 = vrot.slane %v28, %v32
  %v34 = vlaneseq
  %v35 = vshrl.u32 %v34, 7
  %v36 = vsub.s32 1, %v35
  %v37 = vrot.slane %v28, %v36
  %v48 = vunpack.c.l.b16 %v20
  %v49 = vunpack.c.h.b16 %v20
  %v50 = vunpack.c.l.b16 %v21
  %v51 = vunpack.c.h.b16 %v21
  %v52 = vunpack.c.l.b16 %v22
  %v53 = vunpack.c.h.b16 %v22
  %v54 = vunpack.c.l.b16 %v23
  %v55 = vunpack.c.h.b16 %v23
  %v56 = vunpack.c.l.b16 %v24
  %v57 = vunpack.c.h.b16 %v24
  %v58 = vunpack.c.l.b16 %v25
  %v59 = vunpack.c.h.b16 %v25
  %v60 = vunpack.c.l.b16 %v26
  %v61 = vunpack.c.h.b16 %v26
  %v62 = vunpack.c.l.b16 %v27
  %v63 = vunpack.c.h.b16 %v27
  %v64 = vpack.c.b16 %v50, %v48
  %v65 = vpack.c.b16 %v51, %v49
  %v66 = vpack.c.b16 %v54, %v52
  %v67 = vpack.c.b16 %v55, %v53
  %v68 = vpack.c.b16 %v58, %v56
  %v69 = vpack.c.b16 %v59, %v57
  %v70 = vpack.c.b16 %v62, %v60
  %v71 = vpack.c.b16 %v63, %v61
  %vm80 = vcmask 523264
  %v82 = vsel %vm80, %v19, 0
  %84 = vmatprep.subr.bf16.mxu0 0
  %85 = vmatpush1.bf16.msra.mxu0 0
  %86 = vmatprep.subr.bf16.mxu0 0
  %87 = vmatpush1.bf16.msra.mxu0 0
  %88 = vmatprep.subr.bf16.mxu0 0
  %89 = vmatpush1.bf16.msra.mxu0 0
  %90 = vmatprep.subr.bf16.mxu0 0
  %91 = vmatpush1.bf16.msra.mxu0 0
  %92 = vmatprep.subr.bf16.mxu0 %v71
  %93 = vmatpush1.bf16.msra.mxu0 %v70
  %94 = vmatprep.subr.bf16.mxu0 %v69
  %95 = vmatpush1.bf16.msra.mxu0 %v68
  %96 = vmatprep.subr.bf16.mxu0 %v67
  %97 = vmatpush1.bf16.msra.mxu0 %v66
  %98 = vmatprep.subr.bf16.mxu0 %v65
  %99 = vmatpush1.bf16.msra.mxu0 %v64
  %100 = vmatprep.subr.bf16.mxu0 0
  %101 = vmatpush2.bf16.msra.mxu0 0
  %102 = vmatprep.subr.bf16.mxu0 0
  %103 = vmatpush2.bf16.msra.mxu0 0
  %104 = vmatprep.subr.bf16.mxu0 0
  %105 = vmatpush2.bf16.msra.mxu0 0
  %106 = vmatprep.subr.bf16.mxu0 0
  %107 = vmatpush2.bf16.msra.mxu0 0
  %108 = vmatprep.subr.bf16.mxu0 0
  %109 = vmatpush2.bf16.msra.mxu0 0
  %110 = vmatprep.subr.bf16.mxu0 0
  %111 = vmatpush2.bf16.msra.mxu0 0
  %112 = vmatprep.subr.bf16.mxu0 0
  %113 = vmatpush2.bf16.msra.mxu0 0
  %114 = vmatprep.subr.bf16.mxu0 0
  %115 = vmatpush2.bf16.msra.mxu0 0
  %116 = vmatprep.mubr.bf16.mxu0 0
  %117 = vmatmul.mubr.bf16.gmra.mxu0 %v82
  %v118 = vpop.f32.mrf.mxu0
  %v119 = vadd.f32 %v33, %v118
  %v120 = vpop.f32.mrf.mxu0
  %v121 = vadd.f32 %v37, %v120
  %v122 = vpop.f32.mrf.mxu0
  %v123 = vadd.f32 %v33, %v122
  %v124 = vpop.f32.mrf.mxu0
  %v125 = vadd.f32 %v37, %v124
  %126 = vdwg.mxu0
  %127 = vst [vmem:[%s3] sm:$0xff] %v119
  %128 = vst [vmem:[%s3 + $0x8] sm:$0xff] %v123
  %129 = vst [vmem:[%s4] sm:$0xff] %v121
  %130 = vst [vmem:[%s4 + $0x8] sm:$0xff] %v125
  // Predicated region
  $region14: #{supervised_model_al_forward.7} parent=0 // pred_check
    _
  $region15: #{supervised_model_al_forward.7} parent=0 // pred_check_branch
    %132 = sbr.rel (0) target = $region17
  $region16: #{supervised_model_al_forward.7} parent=0 // pred_region
    _
  $region17: #{supervised_model_al_forward.7} parent=0 // pred_fallthru
    _
  // Predicated region
  $region18: #{supervised_model_al_forward.7} parent=0 // pred_check
    _
  $region19: #{supervised_model_al_forward.7} parent=0 // pred_check_branch
    %134 = sbr.rel (0) target = $region21
  $region20: #{supervised_model_al_forward.7} parent=0 // pred_region
    _
  $region21: #{supervised_model_al_forward.7} parent=0 // pred_fallthru
    _
  // Predicated region
  $region22: #{supervised_model_al_forward.7} parent=0 // pred_check
    _
  $region23: #{supervised_model_al_forward.7} parent=0 // pred_check_branch
    %136 = sbr.rel (0) target = $region25
  $region24: #{supervised_model_al_forward.7} parent=0 // pred_region
    _
  $region25: #{supervised_model_al_forward.7} parent=0 // pred_fallthru
    _
  // Predicated region
  $region26: #{supervised_model_al_forward.7} parent=0 // pred_check
    _
  $region27: #{supervised_model_al_forward.7} parent=0 // pred_check_branch
    %138 = sbr.rel (0) target = $region29
  $region28: #{supervised_model_al_forward.7} parent=0 // pred_region
    _
  $region29: #{supervised_model_al_forward.7} parent=0 // pred_fallthru
    _

// kernel: supervised_model_al_forward.5
$region0: #{supervised_model_al_forward.5}
  #allocation0 [shape = 'u32[]', space=smem, size = 0x4, offset = 0x4, fixed_abs, tag = 'smem constant byte address 0x4 - core index']
  #allocation1 [shape = 'u32[144,128]{1,0:T(1,128)}', space=vmem, size = 0x12000, scoped, tag = 'internal scratch']
  %s0 = inlined_call_operand.hbm [shape: f32[16,300], index: 0, kind: input, shape index: {}]
  %s1 = inlined_call_operand.hbm [shape: bf16[300,256], index: 1, kind: input, shape index: {}]
  %s2 = inlined_call_operand.vmem [shape: f32[1,256], index: 2, kind: input, shape index: {}]
  %s3 = inlined_call_operand.vmem [shape: f32[16,128], index: 3, kind: output, shape index: {0}]
  %s4 = inlined_call_operand.vmem [shape: f32[16,128], index: 4, kind: output, shape index: {1}]
  %5 = xla_tuple %s3, %s4
  %s6 = sld [smem:[#allocation0]]
  $region38: #{supervised_model_al_forward.5} parent=0
    _
  %s8 = ssub.s32 1, %s6
  %s9 = scalar_select 0, %s8, %s6
  $region1: #{supervised_model_al_forward.5} parent=0
    #allocation2 [shape = 'u8[24576]{0}', space=vmem, size = 0x6000, scoped, tag = 'input window, operand 0, single buffered']
    #allocation3 [shape = 's32[1]{0}', space=sflag, size = 0x4, scoped, tag = 'scoped memory for supervised_model_al_forward.5']
    #allocation4 [shape = 'u8[155648]{0}', space=vmem, size = 0x26000, scoped, tag = 'input window, operand 1, single buffered']
    #allocation5 [shape = 's32[1]{0}', space=sflag, size = 0x4, scoped, tag = 'scoped memory for supervised_model_al_forward.5']
    %10 = vsyncpa [#allocation3], 0
    %11 = vsyncpa [#allocation5], 0
    // Predicated region
    $region2: #{supervised_model_al_forward.5} parent=1 // pred_check
      _
    $region3: #{supervised_model_al_forward.5} parent=1 // pred_check_branch
      %13 = sbr.rel (0) target = $region5
    $region4: #{supervised_model_al_forward.5} parent=1 // pred_region
      %s15 = ssub.s32 768, 768
      %16 = vsyncadd [#allocation3], %s15
      %s17 = sshll.u32 [#allocation2], 4
      %s18 = int_to_ptr.vmem [resolvable:$true] %s17
      %23 = dma.hbm_to_vmem [thread:$0]  %s0, 768, %s18, [#allocation3], 384, 384, 24
    $region5: #{supervised_model_al_forward.5} parent=1 // pred_fallthru
      _
    // Predicated region
    $region6: #{supervised_model_al_forward.5} parent=1 // pred_check
      _
    $region7: #{supervised_model_al_forward.5} parent=1 // pred_check_branch
      %25 = sbr.rel (0) target = $region9
    $region8: #{supervised_model_al_forward.5} parent=1 // pred_region
      %s27 = ssub.s32 4864, 4864
      %28 = vsyncadd [#allocation5], %s27
      %s29 = sshll.u32 [#allocation4], 4
      %s30 = int_to_ptr.vmem [resolvable:$true] %s29
      %35 = dma.hbm_to_vmem [thread:$0]  %s1, 4864, %s30, [#allocation5], 128, 128, 8
    $region9: #{supervised_model_al_forward.5} parent=1 // pred_fallthru
      _
    // Predicated region
    $region10: #{supervised_model_al_forward.5} parent=1 // pred_check
      _
    $region11: #{supervised_model_al_forward.5} parent=1 // pred_check_branch
      %37 = sbr.rel (0) target = $region13
    $region12: #{supervised_model_al_forward.5} parent=1 // pred_region
      _
    $region13: #{supervised_model_al_forward.5} parent=1 // pred_fallthru
      _
    // Predicated region
    $region14: #{supervised_model_al_forward.5} parent=1 // pred_check
      _
    $region15: #{supervised_model_al_forward.5} parent=1 // pred_check_branch
      %39 = sbr.rel (0) target = $region17
    $region16: #{supervised_model_al_forward.5} parent=1 // pred_region
      %40 = dma.done [#allocation3], 768
    $region17: #{supervised_model_al_forward.5} parent=1 // pred_fallthru
      _
    // Predicated region
    $region18: #{supervised_model_al_forward.5} parent=1 // pred_check
      _
    $region19: #{supervised_model_al_forward.5} parent=1 // pred_check_branch
      %42 = sbr.rel (0) target = $region21
    $region20: #{supervised_model_al_forward.5} parent=1 // pred_region
      %43 = dma.done [#allocation5], 4864
    $region21: #{supervised_model_al_forward.5} parent=1 // pred_fallthru
      _
    %v45 = vld [vmem:[#allocation2] sm:$0xff]
    %v46 = vld [vmem:[#allocation2 + $0x8] sm:$0xff]
    %v47 = vld [vmem:[#allocation2 + $0x10] sm:$0xff]
    %v48 = vld [vmem:[#allocation2 + $0x18] sm:$0xff]
    %v49 = vld [vmem:[#allocation2 + $0x20] sm:$0xff]
    %v50 = vld [vmem:[#allocation2 + $0x28] sm:$0xff]
    %v51 = vpack.c.bf16 %v48, %v45
    %v52 = vpack.c.bf16 %v49, %v46
    %v53 = vpack.c.bf16 %v50, %v47
    %v54 = vld [vmem:[#allocation4] sm:$0xff]
    %v55 = vld [vmem:[#allocation4 + $0x8] sm:$0xff]
    %v56 = vld [vmem:[#allocation4 + $0x10] sm:$0xff]
    %v57 = vld [vmem:[#allocation4 + $0x18] sm:$0xff]
    %v58 = vld [vmem:[#allocation4 + $0x20] sm:$0xff]
    %v59 = vld [vmem:[#allocation4 + $0x28] sm:$0xff]
    %v60 = vld [vmem:[#allocation4 + $0x30] sm:$0xff]
    %v61 = vld [vmem:[#allocation4 + $0x38] sm:$0xff]
    %v62 = vld [vmem:[#allocation4 + $0x40] sm:$0xff]
    %v63 = vld [vmem:[#allocation4 + $0x48] sm:$0xff]
    %v64 = vld [vmem:[#allocation4 + $0x50] sm:$0xff]
    %v65 = vld [vmem:[#allocation4 + $0x58] sm:$0xff]
    %v66 = vld [vmem:[#allocation4 + $0x60] sm:$0xff]
    %v67 = vld [vmem:[#allocation4 + $0x68] sm:$0xff]
    %v68 = vld [vmem:[#allocation4 + $0x70] sm:$0xff]
    %v69 = vld [vmem:[#allocation4 + $0x78] sm:$0xff]
    %v70 = vld [vmem:[#allocation4 + $0x80] sm:$0xff]
    %v71 = vld [vmem:[#allocation4 + $0x88] sm:$0xff]
    %v72 = vld [vmem:[#allocation4 + $0x90] sm:$0xff]
    %v73 = vld [vmem:[#allocation4 + $0x98] sm:$0xff]
    %v74 = vld [vmem:[#allocation4 + $0xa0] sm:$0xff]
    %v75 = vld [vmem:[#allocation4 + $0xa8] sm:$0xff]
    %v76 = vld [vmem:[#allocation4 + $0xb0] sm:$0xff]
    %v77 = vld [vmem:[#allocation4 + $0xb8] sm:$0xff]
    %v78 = vld [vmem:[#allocation4 + $0xc0] sm:$0xff]
    %v79 = vld [vmem:[#allocation4 + $0xc8] sm:$0xff]
    %v80 = vld [vmem:[#allocation4 + $0xd0] sm:$0xff]
    %v81 = vld [vmem:[#allocation4 + $0xd8] sm:$0xff]
    %v82 = vld [vmem:[#allocation4 + $0xe0] sm:$0xff]
    %v83 = vld [vmem:[#allocation4 + $0xe8] sm:$0xff]
    %v84 = vld [vmem:[#allocation4 + $0xf0] sm:$0xff]
    %v85 = vld [vmem:[#allocation4 + $0xf8] sm:$0xff]
    %v86 = vld [vmem:[#allocation4 + $0x100] sm:$0xff]
    %v87 = vld [vmem:[#allocation4 + $0x108] sm:$0xff]
    %v88 = vld [vmem:[#allocation4 + $0x110] sm:$0xff]
    %v89 = vld [vmem:[#allocation4 + $0x118] sm:$0xff]
    %v90 = vld [vmem:[#allocation4 + $0x120] sm:$0xff]
    %v91 = vld [vmem:[#allocation4 + $0x128] sm:$0x33]
    %v92 = vld [vmem:[%s2] sm:$0x3]
    %v94 = vlaneseq
    %v95 = vshrl.u32 %v94, 7
    %v96 = vsub.s32 0, %v95
    %v97 = vrot.slane %v92, %v96
    %v98 = vlaneseq
    %v99 = vshrl.u32 %v98, 7
    %v100 = vsub.s32 1, %v99
    %v101 = vrot.slane %v92, %v100
    %v142 = vunpack.c.l.b16 %v54
    %v143 = vunpack.c.h.b16 %v54
    %v144 = vunpack.c.l.b16 %v55
    %v145 = vunpack.c.h.b16 %v55
    %v146 = vunpack.c.l.b16 %v56
    %v147 = vunpack.c.h.b16 %v56
    %v148 = vunpack.c.l.b16 %v57
    %v149 = vunpack.c.h.b16 %v57
    %v150 = vunpack.c.l.b16 %v58
    %v151 = vunpack.c.h.b16 %v58
    %v152 = vunpack.c.l.b16 %v59
    %v153 = vunpack.c.h.b16 %v59
    %v154 = vunpack.c.l.b16 %v60
    %v155 = vunpack.c.h.b16 %v60
    %v156 = vunpack.c.l.b16 %v61
    %v157 = vunpack.c.h.b16 %v61
    %v158 = vunpack.c.l.b16 %v62
    %v159 = vunpack.c.h.b16 %v62
    %v160 = vunpack.c.l.b16 %v63
    %v161 = vunpack.c.h.b16 %v63
    %v162 = vunpack.c.l.b16 %v64
    %v163 = vunpack.c.h.b16 %v64
    %v164 = vunpack.c.l.b16 %v65
    %v165 = vunpack.c.h.b16 %v65
    %v166 = vunpack.c.l.b16 %v66
    %v167 = vunpack.c.h.b16 %v66
    %v168 = vunpack.c.l.b16 %v67
    %v169 = vunpack.c.h.b16 %v67
    %v170 = vunpack.c.l.b16 %v68
    %v171 = vunpack.c.h.b16 %v68
    %v172 = vunpack.c.l.b16 %v69
    %v173 = vunpack.c.h.b16 %v69
    %v174 = vunpack.c.l.b16 %v70
    %v175 = vunpack.c.h.b16 %v70
    %v176 = vunpack.c.l.b16 %v71
    %v177 = vunpack.c.h.b16 %v71
    %v178 = vunpack.c.l.b16 %v72
    %v179 = vunpack.c.h.b16 %v72
    %v180 = vunpack.c.l.b16 %v73
    %v181 = vunpack.c.h.b16 %v73
    %v182 = vunpack.c.l.b16 %v74
    %v183 = vunpack.c.h.b16 %v74
    %v184 = vunpack.c.l.b16 %v75
    %v185 = vunpack.c.h.b16 %v75
    %v186 = vunpack.c.l.b16 %v76
    %v187 = vunpack.c.h.b16 %v76
    %v188 = vunpack.c.l.b16 %v77
    %v189 = vunpack.c.h.b16 %v77
    %v190 = vunpack.c.l.b16 %v78
    %v191 = vunpack.c.h.b16 %v78
    %v192 = vunpack.c.l.b16 %v79
    %v193 = vunpack.c.h.b16 %v79
    %v194 = vunpack.c.l.b16 %v80
    %v195 = vunpack.c.h.b16 %v80
    %v196 = vunpack.c.l.b16 %v81
    %v197 = vunpack.c.h.b16 %v81
    %v198 = vunpack.c.l.b16 %v82
    %v199 = vunpack.c.h.b16 %v82
    %v200 = vunpack.c.l.b16 %v83
    %v201 = vunpack.c.h.b16 %v83
    %v202 = vunpack.c.l.b16 %v84
    %v203 = vunpack.c.h.b16 %v84
    %v204 = vunpack.c.l.b16 %v85
    %v205 = vunpack.c.h.b16 %v85
    %v206 = vunpack.c.l.b16 %v86
    %v207 = vunpack.c.h.b16 %v86
    %v208 = vunpack.c.l.b16 %v87
    %v209 = vunpack.c.h.b16 %v87
    %v210 = vunpack.c.l.b16 %v88
    %v211 = vunpack.c.h.b16 %v88
    %v212 = vunpack.c.l.b16 %v89
    %v213 = vunpack.c.h.b16 %v89
    %v214 = vunpack.c.l.b16 %v90
    %v215 = vunpack.c.h.b16 %v90
    %v216 = vunpack.c.l.b16 %v91
    %v217 = vunpack.c.h.b16 %v91
    %v218 = vpack.c.b16 %v144, %v142
    %v219 = vpack.c.b16 %v145, %v143
    %v220 = vpack.c.b16 %v148, %v146
    %v221 = vpack.c.b16 %v149, %v147
    %v222 = vpack.c.b16 %v152, %v150
    %v223 = vpack.c.b16 %v153, %v151
    %v224 = vpack.c.b16 %v156, %v154
    %v225 = vpack.c.b16 %v157, %v155
    %v226 = vpack.c.b16 %v160, %v158
    %v227 = vpack.c.b16 %v161, %v159
    %v228 = vpack.c.b16 %v164, %v162
    %v229 = vpack.c.b16 %v165, %v163
    %v230 = vpack.c.b16 %v168, %v166
    %v231 = vpack.c.b16 %v169, %v167
    %v232 = vpack.c.b16 %v172, %v170
    %v233 = vpack.c.b16 %v173, %v171
    %v234 = vpack.c.b16 %v176, %v174
    %v235 = vpack.c.b16 %v177, %v175
    %v236 = vpack.c.b16 %v180, %v178
    %v237 = vpack.c.b16 %v181, %v179
    %v238 = vpack.c.b16 %v184, %v182
    %v239 = vpack.c.b16 %v185, %v183
    %v240 = vpack.c.b16 %v188, %v186
    %v241 = vpack.c.b16 %v189, %v187
    %v242 = vpack.c.b16 %v192, %v190
    %v243 = vpack.c.b16 %v193, %v191
    %v244 = vpack.c.b16 %v196, %v194
    %v245 = vpack.c.b16 %v197, %v195
    %v246 = vpack.c.b16 %v200, %v198
    %v247 = vpack.c.b16 %v201, %v199
    %v248 = vpack.c.b16 %v204, %v202
    %v249 = vpack.c.b16 %v205, %v203
    %v250 = vpack.c.b16 %v208, %v206
    %v251 = vpack.c.b16 %v209, %v207
    %v252 = vpack.c.b16 %v212, %v210
    %v253 = vpack.c.b16 %v213, %v211
    %v254 = vpack.c.b16 %v216, %v214
    %v255 = vpack.c.b16 %v217, %v215
    %vm292 = vcmask 359424
    %v294 = vsel %vm292, %v53, 0
    %vm296 = vcmask 1045504
    %v298 = vsel %vm296, %v254, 0
    %v301 = vsel %vm296, %v255, 0
    %303 = vmatprep.subr.bf16.mxu0 %v233
    %304 = vmatpush1.bf16.msra.mxu0 %v232
    %305 = vmatprep.subr.bf16.mxu0 %v231
    %306 = vmatpush1.bf16.msra.mxu0 %v230
    %307 = vmatprep.subr.bf16.mxu0 %v229
    %308 = vmatpush1.bf16.msra.mxu0 %v228
    %309 = vmatprep.subr.bf16.mxu0 %v227
    %310 = vmatpush1.bf16.msra.mxu0 %v226
    %311 = vmatprep.subr.bf16.mxu0 %v225
    %312 = vmatpush1.bf16.msra.mxu0 %v224
    %313 = vmatprep.subr.bf16.mxu0 %v223
    %314 = vmatpush1.bf16.msra.mxu0 %v222
    %315 = vmatprep.subr.bf16.mxu0 %v221
    %316 = vmatpush1.bf16.msra.mxu0 %v220
    %317 = vmatprep.subr.bf16.mxu0 %v219
    %318 = vmatpush1.bf16.msra.mxu0 %v218
    %319 = vmatprep.subr.bf16.mxu0 %v249
    %320 = vmatpush2.bf16.msra.mxu0 %v248
    %321 = vmatprep.subr.bf16.mxu0 %v247
    %322 = vmatpush2.bf16.msra.mxu0 %v246
    %323 = vmatprep.subr.bf16.mxu0 %v245
    %324 = vmatpush2.bf16.msra.mxu0 %v244
    %325 = vmatprep.subr.bf16.mxu0 %v243
    %326 = vmatpush2.bf16.msra.mxu0 %v242
    %327 = vmatprep.subr.bf16.mxu0 %v241
    %328 = vmatpush2.bf16.msra.mxu0 %v240
    %329 = vmatprep.subr.bf16.mxu0 %v239
    %330 = vmatpush2.bf16.msra.mxu0 %v238
    %331 = vmatprep.subr.bf16.mxu0 %v237
    %332 = vmatpush2.bf16.msra.mxu0 %v236
    %333 = vmatprep.subr.bf16.mxu0 %v235
    %334 = vmatpush2.bf16.msra.mxu0 %v234
    %335 = vmatprep.mubr.bf16.mxu0 %v52
    %336 = vmatmul.mubr.bf16.gmra.mxu0 %v51
    %v337 = vpop.f32.mrf.mxu0
    %v338 = vadd.f32 %v97, %v337
    %v339 = vpop.f32.mrf.mxu0
    %v340 = vadd.f32 %v101, %v339
    %v341 = vpop.f32.mrf.mxu0
    %v342 = vadd.f32 %v97, %v341
    %v343 = vpop.f32.mrf.mxu0
    %v344 = vadd.f32 %v101, %v343
    %345 = vdwg.mxu0
    %346 = vmatprep.subr.bf16.mxu0 0
    %347 = vmatpush1.bf16.msra.mxu0 0
    %348 = vmatprep.subr.bf16.mxu0 0
    %349 = vmatpush1.bf16.msra.mxu0 0
    %350 = vmatprep.subr.bf16.mxu0 0
    %351 = vmatpush1.bf16.msra.mxu0 0
    %352 = vmatprep.subr.bf16.mxu0 0
    %353 = vmatpush1.bf16.msra.mxu0 0
    %354 = vmatprep.subr.bf16.mxu0 0
    %355 = vmatpush1.bf16.msra.mxu0 0
    %356 = vmatprep.subr.bf16.mxu0 %v301
    %357 = vmatpush1.bf16.msra.mxu0 %v298
    %358 = vmatprep.subr.bf16.mxu0 %v253
    %359 = vmatpush1.bf16.msra.mxu0 %v252
    %360 = vmatprep.subr.bf16.mxu0 %v251
    %361 = vmatpush1.bf16.msra.mxu0 %v250
    %362 = vmatprep.subr.bf16.mxu0 0
    %363 = vmatpush2.bf16.msra.mxu0 0
    %364 = vmatprep.subr.bf16.mxu0 0
    %365 = vmatpush2.bf16.msra.mxu0 0
    %366 = vmatprep.subr.bf16.mxu0 0
    %367 = vmatpush2.bf16.msra.mxu0 0
    %368 = vmatprep.subr.bf16.mxu0 0
    %369 = vmatpush2.bf16.msra.mxu0 0
    %370 = vmatprep.subr.bf16.mxu0 0
    %371 = vmatpush2.bf16.msra.mxu0 0
    %372 = vmatprep.subr.bf16.mxu0 0
    %373 = vmatpush2.bf16.msra.mxu0 0
    %374 = vmatprep.subr.bf16.mxu0 0
    %375 = vmatpush2.bf16.msra.mxu0 0
    %376 = vmatprep.subr.bf16.mxu0 0
    %377 = vmatpush2.bf16.msra.mxu0 0
    %378 = vmatprep.mubr.bf16.mxu0 0
    %379 = vmatmul.mubr.bf16.gmra.mxu0 %v294
    %v380 = vpop.f32.mrf.mxu0
    %v381 = vadd.f32 %v338, %v380
    %v382 = vpop.f32.mrf.mxu0
    %v383 = vadd.f32 %v340, %v382
    %v384 = vpop.f32.mrf.mxu0
    %v385 = vadd.f32 %v342, %v384
    %v386 = vpop.f32.mrf.mxu0
    %v387 = vadd.f32 %v344, %v386
    %388 = vdwg.mxu0
    %389 = vst [vmem:[%s3] sm:$0xff] %v381
    %390 = vst [vmem:[%s3 + $0x8] sm:$0xff] %v385
    %391 = vst [vmem:[%s4] sm:$0xff] %v383
    %392 = vst [vmem:[%s4 + $0x8] sm:$0xff] %v387
    // Predicated region
    $region22: #{supervised_model_al_forward.5} parent=1 // pred_check
      _
    $region23: #{supervised_model_al_forward.5} parent=1 // pred_check_branch
      %394 = sbr.rel (0) target = $region25
    $region24: #{supervised_model_al_forward.5} parent=1 // pred_region
      _
    $region25: #{supervised_model_al_forward.5} parent=1 // pred_fallthru
      _
    // Predicated region
    $region26: #{supervised_model_al_forward.5} parent=1 // pred_check
      _
    $region27: #{supervised_model_al_forward.5} parent=1 // pred_check_branch
      %396 = sbr.rel (0) target = $region29
    $region28: #{supervised_model_al_forward.5} parent=1 // pred_region
      _
    $region29: #{supervised_model_al_forward.5} parent=1 // pred_fallthru
      _
    // Predicated region
    $region30: #{supervised_model_al_forward.5} parent=1 // pred_check
      _
    $region31: #{supervised_model_al_forward.5} parent=1 // pred_check_branch
      %398 = sbr.rel (0) target = $region33
    $region32: #{supervised_model_al_forward.5} parent=1 // pred_region
      _
    $region33: #{supervised_model_al_forward.5} parent=1 // pred_fallthru
      _
    // Predicated region
    $region34: #{supervised_model_al_forward.5} parent=1 // pred_check
      _
    $region35: #{supervised_model_al_forward.5} parent=1 // pred_check_branch
      %400 = sbr.rel (0) target = $region37
    $region36: #{supervised_model_al_forward.5} parent=1 // pred_region
      _
    $region37: #{supervised_model_al_forward.5} parent=1 // pred_fallthru
      _
    %401 = vsyncpa [#allocation3], 1
    %402 = vsyncpa [#allocation5], 1

// kernel: supervised_model_al_forward.6
$region0: #{supervised_model_al_forward.6}
  #allocation0 [shape = 'u32[]', space=smem, size = 0x4, offset = 0x4, fixed_abs, tag = 'smem constant byte address 0x4 - core index']
  #allocation1 [shape = 'u32[144,128]{1,0:T(1,128)}', space=vmem, size = 0x12000, scoped, tag = 'internal scratch']
  #allocation2 [shape = 'f32[8,2,32]{2,1,0:T(2,128)}', space=vmem, size = 0x2000, scoped, tag = 'scratch operand']
  #allocation3 [shape = 'f32[8,2,32]{2,1,0:T(2,128)}', space=vmem, size = 0x2000, scoped, tag = 'scratch operand']
  #allocation4 [shape = 'f32[2,32]{1,0:T(2,128)}', space=vmem, size = 0x400, scoped, tag = 'scratch operand']
  #allocation5 [shape = 'f32[2,32]{1,0:T(2,128)}', space=vmem, size = 0x400, scoped, tag = 'scratch operand']
  #allocation6 [shape = 'f32[2,32]{1,0:T(2,128)}', space=vmem, size = 0x400, scoped, tag = 'scratch operand']
  #allocation7 [shape = 'f32[2,32]{1,0:T(2,128)}', space=vmem, size = 0x400, scoped, tag = 'scratch operand']
  %s0 = inlined_call_operand.vmem [shape: f32[8,2,128], index: 0, kind: input, shape index: {}]
  %s1 = inlined_call_operand.vmem [shape: f32[8,2,128], index: 1, kind: input, shape index: {}]
  %s2 = inlined_call_operand.vmem [shape: bf16[2,32,128], index: 2, kind: input, shape index: {}]
  %s3 = inlined_call_operand.vmem [shape: f32[8,2,64], index: 3, kind: output, shape index: {}]
  %s4 = sld [smem:[#allocation0]]
  $region29: #{supervised_model_al_forward.6} parent=0
    _
  %s6 = ssub.s32 1, %s4
  %s7 = scalar_select 0, %s6, %s4
  // Predicated region
  $region2: #{supervised_model_al_forward.6} parent=0 // pred_check
    _
  $region3: #{supervised_model_al_forward.6} parent=0 // pred_check_branch
    %9 = sbr.rel (0) target = $region5
  $region4: #{supervised_model_al_forward.6} parent=0 // pred_region
    _
  $region5: #{supervised_model_al_forward.6} parent=0 // pred_fallthru
    _
  // Predicated region
  $region6: #{supervised_model_al_forward.6} parent=0 // pred_check
    _
  $region7: #{supervised_model_al_forward.6} parent=0 // pred_check_branch
    %11 = sbr.rel (0) target = $region9
  $region8: #{supervised_model_al_forward.6} parent=0 // pred_region
    _
  $region9: #{supervised_model_al_forward.6} parent=0 // pred_fallthru
    _
  // Predicated region
  $region10: #{supervised_model_al_forward.6} parent=0 // pred_check
    _
  $region11: #{supervised_model_al_forward.6} parent=0 // pred_check_branch
    %13 = sbr.rel (0) target = $region13
  $region12: #{supervised_model_al_forward.6} parent=0 // pred_region
    _
  $region13: #{supervised_model_al_forward.6} parent=0 // pred_fallthru
    _
  %vm15 = vcmask 254976
  %16 = vst.msk [vmem:[#allocation4] sm:$0x3] %vm15, 0.0
  %17 = vst.msk [vmem:[#allocation5] sm:$0x3] %vm15, 0.0
  %18 = vst.msk [vmem:[#allocation6] sm:$0x3] %vm15, 0.0
  %19 = vst.msk [vmem:[#allocation7] sm:$0x3] %vm15, 0.0
  %v20 = vld [vmem:[%s2] sm:$0xf]
  %v21 = vld [vmem:[%s2 + $0x4] sm:$0xf]
  %v22 = vld [vmem:[%s2 + $0x8] sm:$0xf]
  %v23 = vld [vmem:[%s2 + $0xc] sm:$0xf]
  %s24 = scalar_lea.vmem %s2, 16
  %v25 = vld [vmem:[%s24] sm:$0xf]
  %v26 = vld [vmem:[%s24 + $0x4] sm:$0xf]
  %v27 = vld [vmem:[%s24 + $0x8] sm:$0xf]
  %v28 = vld [vmem:[%s24 + $0xc] sm:$0xf]
  %v29 = vlaneseq
  %v30 = vand.u32 %v29, 127
  %vm31 = vcmp.ge.s32.totalorder %v30, 64
  %vm32 = vcmp.lt.s32.totalorder %v30, 96
  %vm33 = vmand %vm31, %vm32
  loop: start=0, step=1, limit=8
  $region14: #{supervised_model_al_forward.6} parent=0 // loop_pre_header
    _
  $region15: #{supervised_model_al_forward.6} parent=0 // loop_header
    %s35 = sphi 0, %s39
    %p36 = scmp.ge.s32.totalorder %s35, 8
  $region16: #{supervised_model_al_forward.6} parent=0 // loop_header_branch
    %38 = sbr.rel (%p36) target = $region20
  $region17: #{supervised_model_al_forward.6} parent=0 // loop_body
    %s40 = ssub.s32 7, %s35
    %s41 = smul.u32 %s35, 2
    %s42 = scalar_lea.vmem %s0, %s41
    %v43 = vld [vmem:[%s42] sm:$0x3]
    %v44 = vld [vmem:[#allocation4] sm:$0x3]
    %v45 = vpack.c.bf16 %v44, %v44
    %v50 = vunpack.c.l.b16 %v20
    %v51 = vunpack.c.l.b16 %v21
    %v52 = vunpack.c.l.b16 %v22
    %v53 = vunpack.c.l.b16 %v23
    %v54 = vpack.c.b16 %v51, %v50
    %v55 = vpack.c.b16 %v53, %v52
    %vm58 = vcmask 261120
    %v60 = vsel %vm58, %v45, 0
    %62 = vmatprep.subr.bf16.mxu0 0
    %63 = vmatpush1.bf16.msra.mxu0 0
    %64 = vmatprep.subr.bf16.mxu0 0
    %65 = vmatpush1.bf16.msra.mxu0 0
    %66 = vmatprep.subr.bf16.mxu0 0
    %67 = vmatpush1.bf16.msra.mxu0 0
    %68 = vmatprep.subr.bf16.mxu0 0
    %69 = vmatpush1.bf16.msra.mxu0 0
    %70 = vmatprep.subr.bf16.mxu0 0
    %71 = vmatpush1.bf16.msra.mxu0 0
    %72 = vmatprep.subr.bf16.mxu0 0
    %73 = vmatpush1.bf16.msra.mxu0 0
    %74 = vmatprep.subr.bf16.mxu0 0
    %75 = vmatpush1.bf16.msra.mxu0 %v55
    %76 = vmatprep.subr.bf16.mxu0 0
    %77 = vmatpush1.bf16.msra.mxu0 %v54
    %78 = vmatprep.subr.bf16.mxu0 0
    %79 = vmatpush2.bf16.msra.mxu0 0
    %80 = vmatprep.subr.bf16.mxu0 0
    %81 = vmatpush2.bf16.msra.mxu0 0
    %82 = vmatprep.subr.bf16.mxu0 0
    %83 = vmatpush2.bf16.msra.mxu0 0
    %84 = vmatprep.subr.bf16.mxu0 0
    %85 = vmatpush2.bf16.msra.mxu0 0
    %86 = vmatprep.subr.bf16.mxu0 0
    %87 = vmatpush2.bf16.msra.mxu0 0
    %88 = vmatprep.subr.bf16.mxu0 0
    %89 = vmatpush2.bf16.msra.mxu0 0
    %90 = vmatprep.subr.bf16.mxu0 0
    %91 = vmatpush2.bf16.msra.mxu0 0
    %92 = vmatprep.subr.bf16.mxu0 0
    %93 = vmatpush2.bf16.msra.mxu0 0
    %94 = vmatprep.mubr.bf16.mxu0 0
    %95 = vmatmul.mubr.bf16.gmra.mxu0 %v60
    %v96 = vpop.f32.mrf.mxu0
    %v97 = vadd.f32 0.0, %v96
    %v98 = vpop.f32.mrf.mxu0
    %v99 = vpop.f32.mrf.mxu0
    %v100 = vpop.f32.mrf.mxu0
    %101 = vdwg.mxu0
    %v102 = vadd.f32 %v43, %v97
    %v103 = vtanh.pop %v102
    %v104 = vxor.u32 %v102, 2147483648
    %v105 = vmul.f32 %v104, 1.442695
    %v106 = vpow.pop %v105
    %v107 = vadd.f32 %v106, 1.0
    %v108 = vrcp.pop %v107
    %v109 = vmul.f32 1.0, %v108
    %v110 = vsel %vm33, %v103, %v109
    %v111 = vld [vmem:[#allocation5] sm:$0x3]
    %113 = vrot.lane.b32.xlu0 %v111, 32
    %v114 = vpop.permute.xlu0 %113
    %v116 = vmul.f32 %v110, %v114
    %118 = vrot.lane.b32.xlu0 %v110, 64
    %v119 = vpop.permute.xlu0 %118
    %v121 = vmul.f32 %v110, %v119
    %123 = vrot.lane.b32.xlu0 %v121, 32
    %v124 = vpop.permute.xlu0 %123
    %v126 = vadd.f32 %v116, %v124
    %v127 = vtanh.pop %v126
    %129 = vrot.lane.b32.xlu0 %v127, 64
    %v130 = vpop.permute.xlu0 %129
    %v132 = vmul.f32 %v110, %v130
    %134 = vrot.lane.b32.xlu0 %v126, 96
    %v135 = vpop.permute.xlu0 %134
    %137 = vst.msk [vmem:[#allocation5] sm:$0x3] %vm15, %v135
    %139 = vrot.lane.b32.xlu0 %v132, 32
    %v140 = vpop.permute.xlu0 %139
    %142 = vst.msk [vmem:[#allocation4] sm:$0x3] %vm15, %v140
    %s143 = scalar_lea.vmem [#allocation2], %s41
    %144 = vst.msk [vmem:[%s143] sm:$0x3] %vm15, %v140
    %s145 = smul.u32 %s40, 2
    %s146 = scalar_lea.vmem %s1, %s145
    %v147 = vld [vmem:[%s146] sm:$0x3]
    %v148 = vld [vmem:[#allocation6] sm:$0x3]
    %v149 = vpack.c.bf16 %v148, %v148
    %v154 = vunpack.c.l.b16 %v25
    %v155 = vunpack.c.l.b16 %v26
    %v156 = vunpack.c.l.b16 %v27
    %v157 = vunpack.c.l.b16 %v28
    %v158 = vpack.c.b16 %v155, %v154
    %v159 = vpack.c.b16 %v157, %v156
    %v163 = vsel %vm58, %v149, 0
    %165 = vmatprep.subr.bf16.mxu0 0
    %166 = vmatpush1.bf16.msra.mxu0 0
    %167 = vmatprep.subr.bf16.mxu0 0
    %168 = vmatpush1.bf16.msra.mxu0 0
    %169 = vmatprep.subr.bf16.mxu0 0
    %170 = vmatpush1.bf16.msra.mxu0 0
    %171 = vmatprep.subr.bf16.mxu0 0
    %172 = vmatpush1.bf16.msra.mxu0 0
    %173 = vmatprep.subr.bf16.mxu0 0
    %174 = vmatpush1.bf16.msra.mxu0 0
    %175 = vmatprep.subr.bf16.mxu0 0
    %176 = vmatpush1.bf16.msra.mxu0 0
    %177 = vmatprep.subr.bf16.mxu0 0
    %178 = vmatpush1.bf16.msra.mxu0 %v159
    %179 = vmatprep.subr.bf16.mxu0 0
    %180 = vmatpush1.bf16.msra.mxu0 %v158
    %181 = vmatprep.subr.bf16.mxu0 0
    %182 = vmatpush2.bf16.msra.mxu0 0
    %183 = vmatprep.subr.bf16.mxu0 0
    %184 = vmatpush2.bf16.msra.mxu0 0
    %185 = vmatprep.subr.bf16.mxu0 0
    %186 = vmatpush2.bf16.msra.mxu0 0
    %187 = vmatprep.subr.bf16.mxu0 0
    %188 = vmatpush2.bf16.msra.mxu0 0
    %189 = vmatprep.subr.bf16.mxu0 0
    %190 = vmatpush2.bf16.msra.mxu0 0
    %191 = vmatprep.subr.bf16.mxu0 0
    %192 = vmatpush2.bf16.msra.mxu0 0
    %193 = vmatprep.subr.bf16.mxu0 0
    %194 = vmatpush2.bf16.msra.mxu0 0
    %195 = vmatprep.subr.bf16.mxu0 0
    %196 = vmatpush2.bf16.msra.mxu0 0
    %197 = vmatprep.mubr.bf16.mxu0 0
    %198 = vmatmul.mubr.bf16.gmra.mxu0 %v163
    %v199 = vpop.f32.mrf.mxu0
    %v200 = vadd.f32 0.0, %v199
    %v201 = vpop.f32.mrf.mxu0
    %v202 = vpop.f32.mrf.mxu0
    %v203 = vpop.f32.mrf.mxu0
    %204 = vdwg.mxu0
    %v205 = vadd.f32 %v147, %v200
    %v206 = vtanh.pop %v205
    %v207 = vxor.u32 %v205, 2147483648
    %v208 = vmul.f32 %v207, 1.442695
    %v209 = vpow.pop %v208
    %v210 = vadd.f32 %v209, 1.0
    %v211 = vrcp.pop %v210
    %v212 = vmul.f32 1.0, %v211
    %v213 = vsel %vm33, %v206, %v212
    %v214 = vld [vmem:[#allocation7] sm:$0x3]
    %216 = vrot.lane.b32.xlu0 %v214, 32
    %v217 = vpop.permute.xlu0 %216
    %v219 = vmul.f32 %v213, %v217
    %221 = vrot.lane.b32.xlu0 %v213, 64
    %v222 = vpop.permute.xlu0 %221
    %v224 = vmul.f32 %v213, %v222
    %226 = vrot.lane.b32.xlu0 %v224, 32
    %v227 = vpop.permute.xlu0 %226
    %v229 = vadd.f32 %v219, %v227
    %v230 = vtanh.pop %v229
    %232 = vrot.lane.b32.xlu0 %v230, 64
    %v233 = vpop.permute.xlu0 %232
    %v235 = vmul.f32 %v213, %v233
    %237 = vrot.lane.b32.xlu0 %v229, 96
    %v238 = vpop.permute.xlu0 %237
    %240 = vst.msk [vmem:[#allocation7] sm:$0x3] %vm15, %v238
    %242 = vrot.lane.b32.xlu0 %v235, 32
    %v243 = vpop.permute.xlu0 %242
    %245 = vst.msk [vmem:[#allocation6] sm:$0x3] %vm15, %v243
    %s246 = scalar_lea.vmem [#allocation3], %s145
    %247 = vst.msk [vmem:[%s246] sm:$0x3] %vm15, %v243
  $region18: #{supervised_model_al_forward.6} parent=0 // loop_footer
    %s39 = sadd.s32 1, %s35
  $region19: #{supervised_model_al_forward.6} parent=0 // loop_footer_branch
    %34 = sbr.rel target = $region15
  $region20: #{supervised_model_al_forward.6} parent=0 // loop_exit
    _
  %v248 = vld [vmem:[#allocation2] sm:$0x3]
  %v249 = vld [vmem:[#allocation2 + $0x2] sm:$0x3]
  %v250 = vld [vmem:[#allocation2 + $0x4] sm:$0x3]
  %v251 = vld [vmem:[#allocation2 + $0x6] sm:$0x3]
  %v252 = vld [vmem:[#allocation2 + $0x8] sm:$0x3]
  %v253 = vld [vmem:[#allocation2 + $0xa] sm:$0x3]
  %v254 = vld [vmem:[#allocation2 + $0xc] sm:$0x3]
  %v255 = vld [vmem:[#allocation2 + $0xe] sm:$0x3]
  %256 = vst.msk [vmem:[%s3] sm:$0x3] %vm15, %v248
  %257 = vst.msk [vmem:[%s3 + $0x2] sm:$0x3] %vm15, %v249
  %258 = vst.msk [vmem:[%s3 + $0x4] sm:$0x3] %vm15, %v250
  %259 = vst.msk [vmem:[%s3 + $0x6] sm:$0x3] %vm15, %v251
  %260 = vst.msk [vmem:[%s3 + $0x8] sm:$0x3] %vm15, %v252
  %261 = vst.msk [vmem:[%s3 + $0xa] sm:$0x3] %vm15, %v253
  %262 = vst.msk [vmem:[%s3 + $0xc] sm:$0x3] %vm15, %v254
  %263 = vst.msk [vmem:[%s3 + $0xe] sm:$0x3] %vm15, %v255
  %v264 = vld [vmem:[#allocation3] sm:$0x3]
  %v265 = vld [vmem:[#allocation3 + $0x2] sm:$0x3]
  %v266 = vld [vmem:[#allocation3 + $0x4] sm:$0x3]
  %v267 = vld [vmem:[#allocation3 + $0x6] sm:$0x3]
  %v268 = vld [vmem:[#allocation3 + $0x8] sm:$0x3]
  %v269 = vld [vmem:[#allocation3 + $0xa] sm:$0x3]
  %v270 = vld [vmem:[#allocation3 + $0xc] sm:$0x3]
  %v271 = vld [vmem:[#allocation3 + $0xe] sm:$0x3]
  %280 = vrot.lane.b32.xlu0 %v264, 32
  %v281 = vpop.permute.xlu0 %280
  %282 = vrot.lane.b32.xlu0 %v265, 32
  %v283 = vpop.permute.xlu0 %282
  %284 = vrot.lane.b32.xlu0 %v266, 32
  %v285 = vpop.permute.xlu0 %284
  %286 = vrot.lane.b32.xlu0 %v267, 32
  %v287 = vpop.permute.xlu0 %286
  %288 = vrot.lane.b32.xlu0 %v268, 32
  %v289 = vpop.permute.xlu0 %288
  %290 = vrot.lane.b32.xlu0 %v269, 32
  %v291 = vpop.permute.xlu0 %290
  %292 = vrot.lane.b32.xlu0 %v270, 32
  %v293 = vpop.permute.xlu0 %292
  %294 = vrot.lane.b32.xlu0 %v271, 32
  %v295 = vpop.permute.xlu0 %294
  %vm304 = vcmask 517376
  %305 = vst.msk [vmem:[%s3] sm:$0x3] %vm304, %v281
  %306 = vst.msk [vmem:[%s3 + $0x2] sm:$0x3] %vm304, %v283
  %307 = vst.msk [vmem:[%s3 + $0x4] sm:$0x3] %vm304, %v285
  %308 = vst.msk [vmem:[%s3 + $0x6] sm:$0x3] %vm304, %v287
  %309 = vst.msk [vmem:[%s3 + $0x8] sm:$0x3] %vm304, %v289
  %310 = vst.msk [vmem:[%s3 + $0xa] sm:$0x3] %vm304, %v291
  %311 = vst.msk [vmem:[%s3 + $0xc] sm:$0x3] %vm304, %v293
  %312 = vst.msk [vmem:[%s3 + $0xe] sm:$0x3] %vm304, %v295
  // Predicated region
  $region21: #{supervised_model_al_forward.6} parent=0 // pred_check
    _
  $region22: #{supervised_model_al_forward.6} parent=0 // pred_check_branch
    %314 = sbr.rel (0) target = $region24
  $region23: #{supervised_model_al_forward.6} parent=0 // pred_region
    _
  $region24: #{supervised_model_al_forward.6} parent=0 // pred_fallthru
    _
  // Predicated region
  $region25: #{supervised_model_al_forward.6} parent=0 // pred_check
    _
  $region26: #{supervised_model_al_forward.6} parent=0 // pred_check_branch
    %316 = sbr.rel (0) target = $region28
  $region27: #{supervised_model_al_forward.6} parent=0 // pred_region
    _
  $region28: #{supervised_model_al_forward.6} parent=0 // pred_fallthru
    _

// kernel: supervised_model_al_forward.9
$region0: #{supervised_model_al_forward.9}
  #allocation0 [shape = 'u32[]', space=smem, size = 0x4, offset = 0x4, fixed_abs, tag = 'smem constant byte address 0x4 - core index']
  #allocation1 [shape = 'u32[144,128]{1,0:T(1,128)}', space=vmem, size = 0x12000, scoped, tag = 'internal scratch']
  %s0 = inlined_call_operand.vmem [shape: f32[16,64], index: 0, kind: input, shape index: {}]
  %s1 = inlined_call_operand.vmem [shape: bf16[64,8], index: 1, kind: input, shape index: {}]
  %s2 = inlined_call_operand.vmem [shape: f32[1,8], index: 2, kind: input, shape index: {}]
  %s3 = inlined_call_operand.vmem [shape: f32[16,8], index: 3, kind: output, shape index: {}]
  %s4 = sld [smem:[#allocation0]]
  $region22: #{supervised_model_al_forward.9} parent=0
    _
  %s6 = ssub.s32 1, %s4
  %s7 = scalar_select 0, %s6, %s4
  // Predicated region
  $region2: #{supervised_model_al_forward.9} parent=0 // pred_check
    _
  $region3: #{supervised_model_al_forward.9} parent=0 // pred_check_branch
    %9 = sbr.rel (0) target = $region5
  $region4: #{supervised_model_al_forward.9} parent=0 // pred_region
    _
  $region5: #{supervised_model_al_forward.9} parent=0 // pred_fallthru
    _
  // Predicated region
  $region6: #{supervised_model_al_forward.9} parent=0 // pred_check
    _
  $region7: #{supervised_model_al_forward.9} parent=0 // pred_check_branch
    %11 = sbr.rel (0) target = $region9
  $region8: #{supervised_model_al_forward.9} parent=0 // pred_region
    _
  $region9: #{supervised_model_al_forward.9} parent=0 // pred_fallthru
    _
  // Predicated region
  $region10: #{supervised_model_al_forward.9} parent=0 // pred_check
    _
  $region11: #{supervised_model_al_forward.9} parent=0 // pred_check_branch
    %13 = sbr.rel (0) target = $region13
  $region12: #{supervised_model_al_forward.9} parent=0 // pred_region
    _
  $region13: #{supervised_model_al_forward.9} parent=0 // pred_fallthru
    _
  %v15 = vld [vmem:[%s0] sm:$0xff]
  %v16 = vld [vmem:[%s0 + $0x8] sm:$0xff]
  %v17 = vpack.c.bf16 %v16, %v15
  %v18 = vld [vmem:[%s1] sm:$0xf]
  %v19 = vld [vmem:[%s1 + $0x4] sm:$0xf]
  %v20 = vld [vmem:[%s1 + $0x8] sm:$0xf]
  %v21 = vld [vmem:[%s1 + $0xc] sm:$0xf]
  %v22 = vld [vmem:[%s1 + $0x10] sm:$0xf]
  %v23 = vld [vmem:[%s1 + $0x14] sm:$0xf]
  %v24 = vld [vmem:[%s1 + $0x18] sm:$0xf]
  %v25 = vld [vmem:[%s1 + $0x1c] sm:$0xf]
  %v26 = vld [vmem:[%s2] sm:$0x1]
  %v28 = vlaneseq
  %v29 = vshrl.u32 %v28, 7
  %v30 = vsub.s32 0, %v29
  %v31 = vrot.slane %v26, %v30
  %v41 = vunpack.c.l.b16 %v18
  %v42 = vunpack.c.l.b16 %v19
  %v43 = vunpack.c.l.b16 %v20
  %v44 = vunpack.c.l.b16 %v21
  %v45 = vunpack.c.l.b16 %v22
  %v46 = vunpack.c.l.b16 %v23
  %v47 = vunpack.c.l.b16 %v24
  %v48 = vunpack.c.l.b16 %v25
  %v49 = vpack.c.b16 %v42, %v41
  %v50 = vpack.c.b16 %v44, %v43
  %v51 = vpack.c.b16 %v46, %v45
  %v52 = vpack.c.b16 %v48, %v47
  %vm57 = vcmask 523264
  %v59 = vsel %vm57, %v17, 0
  %61 = vmatprep.subr.bf16.mxu0 0
  %62 = vmatpush1.bf16.msra.mxu0 0
  %63 = vmatprep.subr.bf16.mxu0 0
  %64 = vmatpush1.bf16.msra.mxu0 0
  %65 = vmatprep.subr.bf16.mxu0 0
  %66 = vmatpush1.bf16.msra.mxu0 0
  %67 = vmatprep.subr.bf16.mxu0 0
  %68 = vmatpush1.bf16.msra.mxu0 0
  %69 = vmatprep.subr.bf16.mxu0 0
  %70 = vmatpush1.bf16.msra.mxu0 %v52
  %71 = vmatprep.subr.bf16.mxu0 0
  %72 = vmatpush1.bf16.msra.mxu0 %v51
  %73 = vmatprep.subr.bf16.mxu0 0
  %74 = vmatpush1.bf16.msra.mxu0 %v50
  %75 = vmatprep.subr.bf16.mxu0 0
  %76 = vmatpush1.bf16.msra.mxu0 %v49
  %77 = vmatprep.subr.bf16.mxu0 0
  %78 = vmatpush2.bf16.msra.mxu0 0
  %79 = vmatprep.subr.bf16.mxu0 0
  %80 = vmatpush2.bf16.msra.mxu0 0
  %81 = vmatprep.subr.bf16.mxu0 0
  %82 = vmatpush2.bf16.msra.mxu0 0
  %83 = vmatprep.subr.bf16.mxu0 0
  %84 = vmatpush2.bf16.msra.mxu0 0
  %85 = vmatprep.subr.bf16.mxu0 0
  %86 = vmatpush2.bf16.msra.mxu0 0
  %87 = vmatprep.subr.bf16.mxu0 0
  %88 = vmatpush2.bf16.msra.mxu0 0
  %89 = vmatprep.subr.bf16.mxu0 0
  %90 = vmatpush2.bf16.msra.mxu0 0
  %91 = vmatprep.subr.bf16.mxu0 0
  %92 = vmatpush2.bf16.msra.mxu0 0
  %93 = vmatprep.mubr.bf16.mxu0 0
  %94 = vmatmul.mubr.bf16.gmra.mxu0 %v59
  %v95 = vpop.f32.mrf.mxu0
  %v96 = vadd.f32 %v31, %v95
  %v97 = vpop.f32.mrf.mxu0
  %v98 = vpop.f32.mrf.mxu0
  %v99 = vadd.f32 %v31, %v98
  %v100 = vpop.f32.mrf.mxu0
  %101 = vdwg.mxu0
  %vm102 = vcmask 64512
  %v103 = vsel %vm102, %v96, -inf
  %104 = vmax.xlane.f32.xlu0 %v103
  %v105 = vpop.xlane.xlu0 %104
  %v106 = vsel %vm102, %v99, -inf
  %107 = vmax.xlane.f32.xlu0 %v106
  %v108 = vpop.xlane.xlu0 %107
  %v109 = vsub.f32 %v96, %v105
  %v110 = vsub.f32 %v99, %v108
  %v111 = vmul.f32 %v109, 1.442695
  %v112 = vpow.pop %v111
  %v113 = vmul.f32 %v110, 1.442695
  %v114 = vpow.pop %v113
  %v115 = vsel %vm102, %v112, 0.0
  %116 = vadd.xlane.f32.xlu0 %v115
  %v117 = vpop.xlane.xlu0 %116
  %v118 = vsel %vm102, %v114, 0.0
  %119 = vadd.xlane.f32.xlu0 %v118
  %v120 = vpop.xlane.xlu0 %119
  %v121 = vlog2.pop %v117
  %v122 = vmul.f32 %v121, 0.6931472
  %v123 = vlog2.pop %v120
  %v124 = vmul.f32 %v123, 0.6931472
  %v125 = vsub.f32 %v109, %v122
  %v126 = vsub.f32 %v110, %v124
  %127 = vst.msk [vmem:[%s3] sm:$0xff] %vm102, %v125
  %128 = vst.msk [vmem:[%s3 + $0x8] sm:$0xff] %vm102, %v126
  // Predicated region
  $region14: #{supervised_model_al_forward.9} parent=0 // pred_check
    _
  $region15: #{supervised_model_al_forward.9} parent=0 // pred_check_branch
    %130 = sbr.rel (0) target = $region17
  $region16: #{supervised_model_al_forward.9} parent=0 // pred_region
    _
  $region17: #{supervised_model_al_forward.9} parent=0 // pred_fallthru
    _
  // Predicated region
  $region18: #{supervised_model_al_forward.9} parent=0 // pred_check
    _
  $region19: #{supervised_model_al_forward.9} parent=0 // pred_check_branch
    %132 = sbr.rel (0) target = $region21
  $region20: #{supervised_model_al_forward.9} parent=0 // pred_region
    _
  $region21: #{supervised_model_al_forward.9} parent=0 // pred_fallthru
    _

</llo_original>
